<compile_context>
chip_gen: v7x
topology: tpu7x:2x2x1
jax: 0.10.0
libtpu: 0.0.40
codegen_flags: <defaults>
</compile_context>

<pallas_src>
import math
import functools

import jax
import jax.numpy as jnp
from jax import lax
from jax.experimental import pallas as pl
from jax.experimental.pallas import tpu as pltpu


def _mha_kernel(x_ref, wqkv_ref, wo_ref, cos_ref, sin_ref, o_ref,
                k_sc, v_sc, attn_sc, *, num_heads, head_dim, q_tile):
    H, D = num_heads, head_dim
    E = H * D
    TQ = q_tile
    t = pl.program_id(1)
    q0 = pl.multiple_of(t * TQ, TQ)

    # ---- per-tile fused QKV projection (bf16 operands, f32 accumulation) ----
    x_t = x_ref[0]                                                  # (TQ, E) bf16
    qkv = jnp.dot(x_t, wqkv_ref[...],
                  preferred_element_type=jnp.float32)               # (TQ, 3E) f32
    q = qkv[:, :E]                                                  # pre-scaled by D**-0.5
    k = qkv[:, E:2 * E]
    v = qkv[:, 2 * E:]

    # ---- interleaved RoPE on the whole (TQ, E) slab via XLU rolls ----
    cos = cos_ref[...]                                              # (TQ, E) f32
    sin = sin_ref[...]
    lane = lax.broadcasted_iota(jnp.int32, (TQ, E), 1)
    even = (lane % 2) == 0

    def rotate_every_two(a):
        # out[2i] = -a[2i+1], out[2i+1] = a[2i]   (wrap-around lanes never selected)
        return jnp.where(even, -pltpu.roll(a, E - 1, axis=1), pltpu.roll(a, 1, axis=1))

    q = q * cos + rotate_every_two(q) * sin
    k = k * cos + rotate_every_two(k) * sin

    # cache this tile's RoPE'd K and V for the later q-tiles of the same batch.
    # (relies on the q-tile grid axis being the innermost, sequential axis)
    k_sc[pl.ds(q0, TQ), :] = k.astype(k_sc.dtype)
    v_sc[pl.ds(q0, TQ), :] = v.astype(v_sc.dtype)
    q = q.astype(jnp.bfloat16)

    # ---- causal attention: online softmax over kv tiles 0..t ----
    for h in range(H):
        q_h = q[:, h * D:(h + 1) * D]                               # (TQ, D) bf16

        def kv_step(j, carry):
            m, l, acc = carry
            k0 = pl.multiple_of(j * TQ, TQ)
            k_blk = k_sc[pl.ds(k0, TQ), h * D:(h + 1) * D]          # (TK, D) bf16
            v_blk = v_sc[pl.ds(k0, TQ), h * D:(h + 1) * D]
            s = lax.dot_general(q_h, k_blk, (((1,), (1,)), ((), ())),
                                preferred_element_type=jnp.float32)  # (TQ, TK) f32
            row = q0 + lax.broadcasted_iota(jnp.int32, s.shape, 0)
            col = k0 + lax.broadcasted_iota(jnp.int32, s.shape, 1)
            s = jnp.where(row >= col, s, -1e30)                      # only non-trivial at j == t
            m_new = jnp.maximum(m, jnp.max(s, axis=-1, keepdims=True))
            alpha = jnp.exp(m - m_new)                               # (TQ, 1) f32
            p = jnp.exp((s - m_new).astype(jnp.bfloat16))            # bf16 EUP exp
            l_new = alpha * l + jnp.sum(p.astype(jnp.float32), axis=-1, keepdims=True)
            acc_new = alpha * acc + jnp.dot(p, v_blk,
                                            preferred_element_type=jnp.float32)
            return m_new, l_new, acc_new

        m0 = jnp.full((TQ, 1), -1e30, jnp.float32)
        l0 = jnp.zeros((TQ, 1), jnp.float32)
        a0 = jnp.zeros((TQ, D), jnp.float32)
        m, l, acc = lax.fori_loop(0, t + 1, kv_step, (m0, l0, a0))

        attn_sc[:, h * D:(h + 1) * D] = (
            acc * pl.reciprocal(l, approx=True)).astype(attn_sc.dtype)

    # ---- dense output projection for this q-tile ----
    o_ref[0] = jnp.dot(attn_sc[...], wo_ref[...],
                       preferred_element_type=jnp.float32).astype(o_ref.dtype)


def precompute_rotary_emb(max_seq_len, dim):
    position = jnp.arange(max_seq_len, dtype=jnp.float32)[:, None]
    div_term = jnp.exp(jnp.arange(0, dim, 2, dtype=jnp.float32)
                       * (-math.log(10000.0) / dim))
    sincos = position * div_term
    return jnp.cos(sincos), jnp.sin(sincos)          # each (max_seq_len, dim//2)


def multihead_attention(x, Wq, Wk, Wv, Wo, num_heads, max_seq_len=2048, q_tile=None):
    """x: (B, S, E) float32.  Wq/Wk/Wv/Wo: (E, E) PyTorch nn.Linear weights."""
    B, S, E = x.shape
    H = num_heads
    assert E % H == 0
    D = E // H
    assert D % 2 == 0
    assert S <= max_seq_len

    if q_tile is None:
        q_tile = S
        for cand in (512, 256, 128, 64, 32, 16, 8):
            if cand <= S and S % cand == 0:
                q_tile = cand
                break
    assert q_tile <= S and S % q_tile == 0
    assert q_tile == S or q_tile % 8 == 0
    n_q_tiles = S // q_tile

    # rotary tables, expanded for interleaved application and tiled across heads
    cos_h, sin_h = precompute_rotary_emb(max_seq_len, D)
    cos_e = jnp.tile(jnp.repeat(cos_h[:S], 2, axis=-1), (1, H)).astype(jnp.float32)  # (S, E)
    sin_e = jnp.tile(jnp.repeat(sin_h[:S], 2, axis=-1), (1, H)).astype(jnp.float32)  # (S, E)

    # fused QKV weights (nn.Linear computes x @ W.T); fold the 1/sqrt(D) score
    # scale into Wq (linear, commutes with RoPE).  bf16 MXU operands, f32 accum.
    scale = D ** -0.5
    Wqkv = jnp.concatenate([Wq.T * scale, Wk.T, Wv.T], axis=1).astype(jnp.bfloat16)
    WoT = Wo.T.astype(jnp.bfloat16)
    x_bf = x.astype(jnp.bfloat16)

    # VMEM limit: leave headroom under the physical per-core capacity
    # (v7x: 64 MiB phys -> ~48 MiB; v5e/v6e: 128 MiB phys -> 112 MiB cap).
    try:
        phys_vmem = pltpu.get_tpu_info().vmem_capacity_bytes
    except Exception:
        phys_vmem = 64 * 1024 * 1024
    vmem_limit = int(min(max(phys_vmem - 16 * 1024 * 1024, 32 * 1024 * 1024),
                         112 * 1024 * 1024))

    kernel = functools.partial(_mha_kernel, num_heads=H, head_dim=D, q_tile=q_tile)

    return pl.pallas_call(
        kernel,
        out_shape=jax.ShapeDtypeStruct((B, S, E), jnp.float32),
        grid_spec=pltpu.PrefetchScalarGridSpec(
            num_scalar_prefetch=0,
            grid=(B, n_q_tiles),
            in_specs=[
                pl.BlockSpec((1, q_tile, E), lambda b, t: (b, t, 0)),  # x tile
                pl.BlockSpec((E, 3 * E), lambda b, t: (0, 0)),         # fused Wqkv (bf16)
                pl.BlockSpec((E, E), lambda b, t: (0, 0)),             # Wo^T (bf16)
                pl.BlockSpec((q_tile, E), lambda b, t: (t, 0)),        # cos tile (f32)
                pl.BlockSpec((q_tile, E), lambda b, t: (t, 0)),        # sin tile (f32)
            ],
            out_specs=pl.BlockSpec((1, q_tile, E), lambda b, t: (b, t, 0)),
            scratch_shapes=[
                pltpu.VMEM((S, E), jnp.bfloat16),        # RoPE'd K cache (lane-dense)
                pltpu.VMEM((S, E), jnp.bfloat16),        # V cache (lane-dense)
                pltpu.VMEM((q_tile, E), jnp.bfloat16),   # per-tile head-output slab
            ],
        ),
        compiler_params=pltpu.CompilerParams(
            dimension_semantics=("parallel", "arbitrary"),
            vmem_limit_bytes=vmem_limit),
    )(x_bf, Wqkv, WoT, cos_e, sin_e)


def reference(x, Wq, Wk, Wv, Wo, num_heads, max_seq_len=2048):
    """Pure-JAX (f32) mirror of the PyTorch forward pass (eval mode, dropout=0)."""
    B, S, E = x.shape
    H = num_heads
    D = E // H
    q = (x @ Wq.T).reshape(B, S, H, D)
    k = (x @ Wk.T).reshape(B, S, H, D)
    v = (x @ Wv.T).reshape(B, S, H, D)

    cos, sin = precompute_rotary_emb(max_seq_len, D)
    cos, sin = cos[:S], sin[:S]                       # (S, D//2)

    def rope(t):
        t2 = t.reshape(B, S, H, D // 2, 2)
        te, to = t2[..., 0], t2[..., 1]
        c = cos[None, :, None, :]
        s = sin[None, :, None, :]
        oe = te * c - to * s
        oo = te * s + to * c
        return jnp.stack([oe, oo], axis=-1).reshape(B, S, H, D)

    q, k = rope(q), rope(k)
    q = q.transpose(0, 2, 1, 3)                       # (B, H, S, D)
    k = k.transpose(0, 2, 1, 3)
    v = v.transpose(0, 2, 1, 3)

    scores = (q @ k.transpose(0, 1, 3, 2)) / math.sqrt(D)
    mask = jnp.tril(jnp.ones((S, S), bool))
    scores = jnp.where(mask, scores, -jnp.inf)
    p = jax.nn.softmax(scores, axis=-1)
    attn = (p @ v).transpose(0, 2, 1, 3).reshape(B, S, E)
    return attn @ Wo.T


if __name__ == "__main__":
    def run_case(B, S, E, H, q_tile=None):
        key = jax.random.PRNGKey(0)
        kx, kq, kk, kv, ko = jax.random.split(key, 5)
        x = jax.random.normal(kx, (B, S, E), jnp.float32)
        bound = 1.0 / math.sqrt(E)
        Wq = jax.random.uniform(kq, (E, E), jnp.float32, -bound, bound)
        Wk = jax.random.uniform(kk, (E, E), jnp.float32, -bound, bound)
        Wv = jax.random.uniform(kv, (E, E), jnp.float32, -bound, bound)
        Wo = jax.random.uniform(ko, (E, E), jnp.float32, -bound, bound)

        out = multihead_attention(x, Wq, Wk, Wv, Wo, num_heads=H, q_tile=q_tile)
        out = jax.block_until_ready(out)
        ref = reference(x, Wq, Wk, Wv, Wo, num_heads=H)
        assert out.shape == (B, S, E)
        err = float(jnp.max(jnp.abs(out - ref)))
        # bf16 operands (x, weights, probabilities) -> relaxed tolerance vs f32 ref
        assert jnp.allclose(out, ref, atol=3e-2, rtol=3e-2), f"max abs err {err}"

    run_case(2, 8, 32, 4)                   # tiny shapes from the module
    run_case(1, 256, 128, 4, q_tile=128)    # multi-q-tile + multi-kv-tile online softmax
    print("KERNEL_OK")
</pallas_src>

<mosaic_0001>
module attributes {stable_mosaic.version = 11 : i64} {
  func.func @_mha_kernel(%arg0: i32, %arg1: i32, %arg2: memref<1x8x32xbf16, #tpu.memory_space<vmem>>, %arg3: memref<32x96xbf16, #tpu.memory_space<vmem>>, %arg4: memref<32x32xbf16, #tpu.memory_space<vmem>>, %arg5: memref<8x32xf32, #tpu.memory_space<vmem>>, %arg6: memref<8x32xf32, #tpu.memory_space<vmem>>, %arg7: memref<1x8x32xf32, #tpu.memory_space<vmem>>, %arg8: memref<8x32xbf16, #tpu.memory_space<vmem>>, %arg9: memref<8x32xbf16, #tpu.memory_space<vmem>>, %arg10: memref<8x32xbf16, #tpu.memory_space<vmem>>) attributes {dimension_semantics = [#tpu.dimension_semantics<parallel>, #tpu.dimension_semantics<arbitrary>], iteration_bounds = array<i64: 2, 1>, scalar_prefetch = 0 : i64, scratch_operands = 3 : i64, tpu.core_type = #tpu.core_type<tc>, window_params = [{transform_indices = @transform_0, window_bounds = array<i64: 1, 8, 32>}, {pipeline_mode = #tpu.pipeline_mode<synchronous>, transform_indices = @transform_1, window_bounds = array<i64: 32, 96>}, {pipeline_mode = #tpu.pipeline_mode<synchronous>, transform_indices = @transform_2, window_bounds = array<i64: 32, 32>}, {transform_indices = @transform_3, window_bounds = array<i64: 8, 32>}, {transform_indices = @transform_4, window_bounds = array<i64: 8, 32>}, {transform_indices = @transform_5, window_bounds = array<i64: 1, 8, 32>}]} {
    %c8_i32 = arith.constant 8 : i32
    %0 = arith.muli %arg1, %c8_i32 : i32
    %1 = tpu.assume_multiple %0, 8 : i32
    %c0 = arith.constant 0 : index
    %c0_0 = arith.constant 0 : index
    %c0_1 = arith.constant 0 : index
    %2 = vector.load %arg2[%c0, %c0_0, %c0_1] : memref<1x8x32xbf16, #tpu.memory_space<vmem>>, vector<1x8x32xbf16>
    %3 = vector.shape_cast %2 : vector<1x8x32xbf16> to vector<8x32xbf16>
    %c0_2 = arith.constant 0 : index
    %c0_3 = arith.constant 0 : index
    %4 = vector.load %arg3[%c0_2, %c0_3] : memref<32x96xbf16, #tpu.memory_space<vmem>>, vector<32x96xbf16>
    %cst = arith.constant dense<0.000000e+00> : vector<8x96xf32>
    %5 = tpu.matmul %3, %4, %cst {dimension_numbers = #tpu.dot_dimension_numbers<[1], [0], [0], [1], [0, 0, 1, 1], [], []>} : vector<8x32xbf16>, vector<32x96xbf16>, vector<8x96xf32> -> vector<8x96xf32>
    %6 = vector.extract_strided_slice %5 {offsets = [0, 0], sizes = [8, 32], strides = [1, 1]} : vector<8x96xf32> to vector<8x32xf32>
    %7 = vector.extract_strided_slice %5 {offsets = [0, 32], sizes = [8, 32], strides = [1, 1]} : vector<8x96xf32> to vector<8x32xf32>
    %8 = vector.extract_strided_slice %5 {offsets = [0, 64], sizes = [8, 32], strides = [1, 1]} : vector<8x96xf32> to vector<8x32xf32>
    %c0_4 = arith.constant 0 : index
    %c0_5 = arith.constant 0 : index
    %9 = vector.load %arg5[%c0_4, %c0_5] : memref<8x32xf32, #tpu.memory_space<vmem>>, vector<8x32xf32>
    %c0_6 = arith.constant 0 : index
    %c0_7 = arith.constant 0 : index
    %10 = vector.load %arg6[%c0_6, %c0_7] : memref<8x32xf32, #tpu.memory_space<vmem>>, vector<8x32xf32>
    %11 = tpu.iota {dimensions = array<i32: 1>} : vector<8x32xi32>
    %c2_i32 = arith.constant 2 : i32
    %c0_i32 = arith.constant 0 : i32
    %12 = arith.cmpi eq, %c2_i32, %c0_i32 : i32
    %c1_i32 = arith.constant 1 : i32
    %13 = arith.select %12, %c1_i32, %c2_i32 : i32
    %14 = vector.broadcast %13 : i32 to vector<8x32xi32>
    %15 = arith.remsi %11, %14 : vector<8x32xi32>
    %c0_i32_8 = arith.constant 0 : i32
    %16 = vector.broadcast %c0_i32_8 : i32 to vector<8x32xi32>
    %17 = arith.cmpi ne, %15, %16 : vector<8x32xi32>
    %c0_i32_9 = arith.constant 0 : i32
    %18 = vector.broadcast %c0_i32_9 : i32 to vector<8x32xi32>
    %19 = arith.cmpi slt, %15, %18 : vector<8x32xi32>
    %c0_i32_10 = arith.constant 0 : i32
    %20 = arith.cmpi slt, %13, %c0_i32_10 : i32
    %21 = vector.broadcast %20 : i1 to vector<8x32xi1>
    %22 = vector.broadcast %21 : vector<8x32xi1> to vector<8x32xi1>
    %23 = arith.xori %19, %22 : vector<8x32xi1>
    %24 = arith.andi %23, %17 : vector<8x32xi1>
    %25 = vector.broadcast %13 : i32 to vector<8x32xi32>
    %26 = arith.addi %15, %25 : vector<8x32xi32>
    %27 = arith.select %24, %26, %15 : vector<8x32xi1>, vector<8x32xi32>
    %c0_i32_11 = arith.constant 0 : i32
    %28 = vector.broadcast %c0_i32_11 : i32 to vector<8x32xi32>
    %29 = arith.cmpi eq, %27, %28 : vector<8x32xi32>
    %30 = arith.mulf %6, %9 : vector<8x32xf32>
    %c31_i32 = arith.constant 31 : i32
    %31 = tpu.dynamic_rotate %6 by %c31_i32 dim 1 : vector<8x32xf32>, i32 -> vector<8x32xf32>
    %cst_12 = arith.constant 0.000000e+00 : f32
    %32 = vector.broadcast %cst_12 : f32 to vector<8x32xf32>
    %33 = arith.subf %32, %31 : vector<8x32xf32>
    %c1_i32_13 = arith.constant 1 : i32
    %34 = tpu.dynamic_rotate %6 by %c1_i32_13 dim 1 : vector<8x32xf32>, i32 -> vector<8x32xf32>
    %35 = arith.select %29, %33, %34 : vector<8x32xi1>, vector<8x32xf32>
    %36 = arith.mulf %35, %10 : vector<8x32xf32>
    %37 = arith.addf %30, %36 : vector<8x32xf32>
    %38 = arith.mulf %7, %9 : vector<8x32xf32>
    %c31_i32_14 = arith.constant 31 : i32
    %39 = tpu.dynamic_rotate %7 by %c31_i32_14 dim 1 : vector<8x32xf32>, i32 -> vector<8x32xf32>
    %cst_15 = arith.constant 0.000000e+00 : f32
    %40 = vector.broadcast %cst_15 : f32 to vector<8x32xf32>
    %41 = arith.subf %40, %39 : vector<8x32xf32>
    %c1_i32_16 = arith.constant 1 : i32
    %42 = tpu.dynamic_rotate %7 by %c1_i32_16 dim 1 : vector<8x32xf32>, i32 -> vector<8x32xf32>
    %43 = arith.select %29, %41, %42 : vector<8x32xi1>, vector<8x32xf32>
    %44 = arith.mulf %43, %10 : vector<8x32xf32>
    %45 = arith.addf %38, %44 : vector<8x32xf32>
    %46 = arith.truncf %45 : vector<8x32xf32> to vector<8x32xbf16>
    %47 = arith.index_cast %1 : i32 to index
    %c0_17 = arith.constant 0 : index
    %48 = vector.load %arg8[%47, %c0_17] : memref<8x32xbf16, #tpu.memory_space<vmem>>, vector<8x32xbf16>
    tpu.vector_store %arg8[%47, %c0_17], %46 {strides = array<i32>} : memref<8x32xbf16, #tpu.memory_space<vmem>>, vector<8x32xbf16>,
    %49 = arith.truncf %8 : vector<8x32xf32> to vector<8x32xbf16>
    %50 = arith.index_cast %1 : i32 to index
    %c0_18 = arith.constant 0 : index
    %51 = vector.load %arg9[%50, %c0_18] : memref<8x32xbf16, #tpu.memory_space<vmem>>, vector<8x32xbf16>
    tpu.vector_store %arg9[%50, %c0_18], %49 {strides = array<i32>} : memref<8x32xbf16, #tpu.memory_space<vmem>>, vector<8x32xbf16>,
    %52 = arith.truncf %37 : vector<8x32xf32> to vector<8x32xbf16>
    %53 = vector.extract_strided_slice %52 {offsets = [0, 0], sizes = [8, 8], strides = [1, 1]} : vector<8x32xbf16> to vector<8x8xbf16>
    %cst_19 = arith.constant -1.000000e+30 : f32
    %54 = vector.broadcast %cst_19 : f32 to vector<8x1xf32>
    %cst_20 = arith.constant 0.000000e+00 : f32
    %55 = vector.broadcast %cst_20 : f32 to vector<8x1xf32>
    %cst_21 = arith.constant 0.000000e+00 : f32
    %56 = vector.broadcast %cst_21 : f32 to vector<8x8xf32>
    %c1_i32_22 = arith.constant 1 : i32
    %57 = arith.addi %arg1, %c1_i32_22 : i32
    %c0_i32_23 = arith.constant 0 : i32
    %58 = arith.subi %57, %c0_i32_23 : i32
    %59 = arith.addi %c0_i32_23, %58 : i32
    %c1_i32_24 = arith.constant 1 : i32
    %60:3 = scf.for %arg11 = %c0_i32_23 to %59 step %c1_i32_24 iter_args(%arg12 = %54, %arg13 = %55, %arg14 = %56) -> (vector<8x1xf32>, vector<8x1xf32>, vector<8x8xf32>)  : i32 {
      %c8_i32_56 = arith.constant 8 : i32
      %111 = arith.muli %arg11, %c8_i32_56 : i32
      %112 = tpu.assume_multiple %111, 8 : i32
      %113 = arith.index_cast %112 : i32 to index
      %c0_57 = arith.constant 0 : index
      %114 = vector.load %arg8[%113, %c0_57] : memref<8x32xbf16, #tpu.memory_space<vmem>>, vector<8x8xbf16>
      %115 = arith.index_cast %112 : i32 to index
      %c0_58 = arith.constant 0 : index
      %116 = vector.load %arg9[%115, %c0_58] : memref<8x32xbf16, #tpu.memory_space<vmem>>, vector<8x8xbf16>
      %cst_59 = arith.constant dense<0.000000e+00> : vector<8x8xf32>
      %117 = tpu.matmul %53, %114, %cst_59 {dimension_numbers = #tpu.dot_dimension_numbers<[1], [1], [0], [0], [0, 0, 1, 0], [], []>} : vector<8x8xbf16>, vector<8x8xbf16>, vector<8x8xf32> -> vector<8x8xf32>
      %118 = tpu.iota {dimensions = array<i32: 0>} : vector<8x8xi32>
      %119 = vector.broadcast %1 : i32 to vector<8x8xi32>
      %120 = arith.addi %119, %118 : vector<8x8xi32>
      %121 = tpu.iota {dimensions = array<i32: 1>} : vector<8x8xi32>
      %122 = vector.broadcast %112 : i32 to vector<8x8xi32>
      %123 = arith.addi %122, %121 : vector<8x8xi32>
      %124 = arith.cmpi sge, %120, %123 : vector<8x8xi32>
      %cst_60 = arith.constant -1.000000e+30 : f32
      %125 = vector.broadcast %cst_60 : f32 to vector<8x8xf32>
      %126 = arith.select %124, %117, %125 : vector<8x8xi1>, vector<8x8xf32>
      %cst_61 = arith.constant dense<0xFF800000> : vector<8xf32>
      %127 = vector.multi_reduction <maximumf>, %126, %cst_61 [1] : vector<8x8xf32> to vector<8xf32>
      %128 = vector.shape_cast %127 : vector<8xf32> to vector<8x1xf32>
      %129 = arith.maximumf %arg12, %128 : vector<8x1xf32>
      %130 = arith.subf %arg12, %129 : vector<8x1xf32>
      %131 = math.exp %130 : vector<8x1xf32>
      %132 = vector.broadcast %129 : vector<8x1xf32> to vector<8x8xf32>
      %133 = arith.subf %126, %132 : vector<8x8xf32>
      %134 = arith.truncf %133 : vector<8x8xf32> to vector<8x8xbf16>
      %135 = math.exp %134 : vector<8x8xbf16>
      %136 = arith.mulf %131, %arg13 : vector<8x1xf32>
      %137 = arith.extf %135 : vector<8x8xbf16> to vector<8x8xf32>
      %cst_62 = arith.constant dense<0.000000e+00> : vector<8xf32>
      %138 = vector.multi_reduction <add>, %137, %cst_62 [1] : vector<8x8xf32> to vector<8xf32>
      %139 = vector.shape_cast %138 : vector<8xf32> to vector<8x1xf32>
      %140 = arith.addf %136, %139 : vector<8x1xf32>
      %141 = vector.broadcast %131 : vector<8x1xf32> to vector<8x8xf32>
      %142 = arith.mulf %141, %arg14 : vector<8x8xf32>
      %cst_63 = arith.constant dense<0.000000e+00> : vector<8x8xf32>
      %143 = tpu.matmul %135, %116, %cst_63 {dimension_numbers = #tpu.dot_dimension_numbers<[1], [0], [0], [1], [0, 0, 1, 1], [], []>} : vector<8x8xbf16>, vector<8x8xbf16>, vector<8x8xf32> -> vector<8x8xf32>
      %144 = arith.addf %142, %143 : vector<8x8xf32>
      scf.yield %129, %140, %144 : vector<8x1xf32>, vector<8x1xf32>, vector<8x8xf32>
    }
    %61 = tpu.reciprocal %60#1 {approx = true} : vector<8x1xf32> -> vector<8x1xf32>
    %62 = vector.broadcast %61 : vector<8x1xf32> to vector<8x8xf32>
    %63 = arith.mulf %60#2, %62 : vector<8x8xf32>
    %64 = arith.truncf %63 : vector<8x8xf32> to vector<8x8xbf16>
    %c0_25 = arith.constant 0 : index
    %c0_26 = arith.constant 0 : index
    %65 = vector.load %arg10[%c0_25, %c0_26] : memref<8x32xbf16, #tpu.memory_space<vmem>>, vector<8x8xbf16>
    tpu.vector_store %arg10[%c0_25, %c0_26], %64 {strides = array<i32>} : memref<8x32xbf16, #tpu.memory_space<vmem>>, vector<8x8xbf16>,
    %66 = vector.extract_strided_slice %52 {offsets = [0, 8], sizes = [8, 8], strides = [1, 1]} : vector<8x32xbf16> to vector<8x8xbf16>
    %cst_27 = arith.constant -1.000000e+30 : f32
    %67 = vector.broadcast %cst_27 : f32 to vector<8x1xf32>
    %cst_28 = arith.constant 0.000000e+00 : f32
    %68 = vector.broadcast %cst_28 : f32 to vector<8x1xf32>
    %cst_29 = arith.constant 0.000000e+00 : f32
    %69 = vector.broadcast %cst_29 : f32 to vector<8x8xf32>
    %c1_i32_30 = arith.constant 1 : i32
    %70 = arith.addi %arg1, %c1_i32_30 : i32
    %c0_i32_31 = arith.constant 0 : i32
    %71 = arith.subi %70, %c0_i32_31 : i32
    %72 = arith.addi %c0_i32_31, %71 : i32
    %c1_i32_32 = arith.constant 1 : i32
    %73:3 = scf.for %arg11 = %c0_i32_31 to %72 step %c1_i32_32 iter_args(%arg12 = %67, %arg13 = %68, %arg14 = %69) -> (vector<8x1xf32>, vector<8x1xf32>, vector<8x8xf32>)  : i32 {
      %c8_i32_56 = arith.constant 8 : i32
      %111 = arith.muli %arg11, %c8_i32_56 : i32
      %112 = tpu.assume_multiple %111, 8 : i32
      %113 = arith.index_cast %112 : i32 to index
      %c8_57 = arith.constant 8 : index
      %114 = vector.load %arg8[%113, %c8_57] : memref<8x32xbf16, #tpu.memory_space<vmem>>, vector<8x8xbf16>
      %115 = arith.index_cast %112 : i32 to index
      %c8_58 = arith.constant 8 : index
      %116 = vector.load %arg9[%115, %c8_58] : memref<8x32xbf16, #tpu.memory_space<vmem>>, vector<8x8xbf16>
      %cst_59 = arith.constant dense<0.000000e+00> : vector<8x8xf32>
      %117 = tpu.matmul %66, %114, %cst_59 {dimension_numbers = #tpu.dot_dimension_numbers<[1], [1], [0], [0], [0, 0, 1, 0], [], []>} : vector<8x8xbf16>, vector<8x8xbf16>, vector<8x8xf32> -> vector<8x8xf32>
      %118 = tpu.iota {dimensions = array<i32: 0>} : vector<8x8xi32>
      %119 = vector.broadcast %1 : i32 to vector<8x8xi32>
      %120 = arith.addi %119, %118 : vector<8x8xi32>
      %121 = tpu.iota {dimensions = array<i32: 1>} : vector<8x8xi32>
      %122 = vector.broadcast %112 : i32 to vector<8x8xi32>
      %123 = arith.addi %122, %121 : vector<8x8xi32>
      %124 = arith.cmpi sge, %120, %123 : vector<8x8xi32>
      %cst_60 = arith.constant -1.000000e+30 : f32
      %125 = vector.broadcast %cst_60 : f32 to vector<8x8xf32>
      %126 = arith.select %124, %117, %125 : vector<8x8xi1>, vector<8x8xf32>
      %cst_61 = arith.constant dense<0xFF800000> : vector<8xf32>
      %127 = vector.multi_reduction <maximumf>, %126, %cst_61 [1] : vector<8x8xf32> to vector<8xf32>
      %128 = vector.shape_cast %127 : vector<8xf32> to vector<8x1xf32>
      %129 = arith.maximumf %arg12, %128 : vector<8x1xf32>
      %130 = arith.subf %arg12, %129 : vector<8x1xf32>
      %131 = math.exp %130 : vector<8x1xf32>
      %132 = vector.broadcast %129 : vector<8x1xf32> to vector<8x8xf32>
      %133 = arith.subf %126, %132 : vector<8x8xf32>
      %134 = arith.truncf %133 : vector<8x8xf32> to vector<8x8xbf16>
      %135 = math.exp %134 : vector<8x8xbf16>
      %136 = arith.mulf %131, %arg13 : vector<8x1xf32>
      %137 = arith.extf %135 : vector<8x8xbf16> to vector<8x8xf32>
      %cst_62 = arith.constant dense<0.000000e+00> : vector<8xf32>
      %138 = vector.multi_reduction <add>, %137, %cst_62 [1] : vector<8x8xf32> to vector<8xf32>
      %139 = vector.shape_cast %138 : vector<8xf32> to vector<8x1xf32>
      %140 = arith.addf %136, %139 : vector<8x1xf32>
      %141 = vector.broadcast %131 : vector<8x1xf32> to vector<8x8xf32>
      %142 = arith.mulf %141, %arg14 : vector<8x8xf32>
      %cst_63 = arith.constant dense<0.000000e+00> : vector<8x8xf32>
      %143 = tpu.matmul %135, %116, %cst_63 {dimension_numbers = #tpu.dot_dimension_numbers<[1], [0], [0], [1], [0, 0, 1, 1], [], []>} : vector<8x8xbf16>, vector<8x8xbf16>, vector<8x8xf32> -> vector<8x8xf32>
      %144 = arith.addf %142, %143 : vector<8x8xf32>
      scf.yield %129, %140, %144 : vector<8x1xf32>, vector<8x1xf32>, vector<8x8xf32>
    }
    %74 = tpu.reciprocal %73#1 {approx = true} : vector<8x1xf32> -> vector<8x1xf32>
    %75 = vector.broadcast %74 : vector<8x1xf32> to vector<8x8xf32>
    %76 = arith.mulf %73#2, %75 : vector<8x8xf32>
    %77 = arith.truncf %76 : vector<8x8xf32> to vector<8x8xbf16>
    %c0_33 = arith.constant 0 : index
    %c8 = arith.constant 8 : index
    %78 = vector.load %arg10[%c0_33, %c8] : memref<8x32xbf16, #tpu.memory_space<vmem>>, vector<8x8xbf16>
    tpu.vector_store %arg10[%c0_33, %c8], %77 {strides = array<i32>} : memref<8x32xbf16, #tpu.memory_space<vmem>>, vector<8x8xbf16>,
    %79 = vector.extract_strided_slice %52 {offsets = [0, 16], sizes = [8, 8], strides = [1, 1]} : vector<8x32xbf16> to vector<8x8xbf16>
    %cst_34 = arith.constant -1.000000e+30 : f32
    %80 = vector.broadcast %cst_34 : f32 to vector<8x1xf32>
    %cst_35 = arith.constant 0.000000e+00 : f32
    %81 = vector.broadcast %cst_35 : f32 to vector<8x1xf32>
    %cst_36 = arith.constant 0.000000e+00 : f32
    %82 = vector.broadcast %cst_36 : f32 to vector<8x8xf32>
    %c1_i32_37 = arith.constant 1 : i32
    %83 = arith.addi %arg1, %c1_i32_37 : i32
    %c0_i32_38 = arith.constant 0 : i32
    %84 = arith.subi %83, %c0_i32_38 : i32
    %85 = arith.addi %c0_i32_38, %84 : i32
    %c1_i32_39 = arith.constant 1 : i32
    %86:3 = scf.for %arg11 = %c0_i32_38 to %85 step %c1_i32_39 iter_args(%arg12 = %80, %arg13 = %81, %arg14 = %82) -> (vector<8x1xf32>, vector<8x1xf32>, vector<8x8xf32>)  : i32 {
      %c8_i32_56 = arith.constant 8 : i32
      %111 = arith.muli %arg11, %c8_i32_56 : i32
      %112 = tpu.assume_multiple %111, 8 : i32
      %113 = arith.index_cast %112 : i32 to index
      %c16_57 = arith.constant 16 : index
      %114 = vector.load %arg8[%113, %c16_57] : memref<8x32xbf16, #tpu.memory_space<vmem>>, vector<8x8xbf16>
      %115 = arith.index_cast %112 : i32 to index
      %c16_58 = arith.constant 16 : index
      %116 = vector.load %arg9[%115, %c16_58] : memref<8x32xbf16, #tpu.memory_space<vmem>>, vector<8x8xbf16>
      %cst_59 = arith.constant dense<0.000000e+00> : vector<8x8xf32>
      %117 = tpu.matmul %79, %114, %cst_59 {dimension_numbers = #tpu.dot_dimension_numbers<[1], [1], [0], [0], [0, 0, 1, 0], [], []>} : vector<8x8xbf16>, vector<8x8xbf16>, vector<8x8xf32> -> vector<8x8xf32>
      %118 = tpu.iota {dimensions = array<i32: 0>} : vector<8x8xi32>
      %119 = vector.broadcast %1 : i32 to vector<8x8xi32>
      %120 = arith.addi %119, %118 : vector<8x8xi32>
      %121 = tpu.iota {dimensions = array<i32: 1>} : vector<8x8xi32>
      %122 = vector.broadcast %112 : i32 to vector<8x8xi32>
      %123 = arith.addi %122, %121 : vector<8x8xi32>
      %124 = arith.cmpi sge, %120, %123 : vector<8x8xi32>
      %cst_60 = arith.constant -1.000000e+30 : f32
      %125 = vector.broadcast %cst_60 : f32 to vector<8x8xf32>
      %126 = arith.select %124, %117, %125 : vector<8x8xi1>, vector<8x8xf32>
      %cst_61 = arith.constant dense<0xFF800000> : vector<8xf32>
      %127 = vector.multi_reduction <maximumf>, %126, %cst_61 [1] : vector<8x8xf32> to vector<8xf32>
      %128 = vector.shape_cast %127 : vector<8xf32> to vector<8x1xf32>
      %129 = arith.maximumf %arg12, %128 : vector<8x1xf32>
      %130 = arith.subf %arg12, %129 : vector<8x1xf32>
      %131 = math.exp %130 : vector<8x1xf32>
      %132 = vector.broadcast %129 : vector<8x1xf32> to vector<8x8xf32>
      %133 = arith.subf %126, %132 : vector<8x8xf32>
      %134 = arith.truncf %133 : vector<8x8xf32> to vector<8x8xbf16>
      %135 = math.exp %134 : vector<8x8xbf16>
      %136 = arith.mulf %131, %arg13 : vector<8x1xf32>
      %137 = arith.extf %135 : vector<8x8xbf16> to vector<8x8xf32>
      %cst_62 = arith.constant dense<0.000000e+00> : vector<8xf32>
      %138 = vector.multi_reduction <add>, %137, %cst_62 [1] : vector<8x8xf32> to vector<8xf32>
      %139 = vector.shape_cast %138 : vector<8xf32> to vector<8x1xf32>
      %140 = arith.addf %136, %139 : vector<8x1xf32>
      %141 = vector.broadcast %131 : vector<8x1xf32> to vector<8x8xf32>
      %142 = arith.mulf %141, %arg14 : vector<8x8xf32>
      %cst_63 = arith.constant dense<0.000000e+00> : vector<8x8xf32>
      %143 = tpu.matmul %135, %116, %cst_63 {dimension_numbers = #tpu.dot_dimension_numbers<[1], [0], [0], [1], [0, 0, 1, 1], [], []>} : vector<8x8xbf16>, vector<8x8xbf16>, vector<8x8xf32> -> vector<8x8xf32>
      %144 = arith.addf %142, %143 : vector<8x8xf32>
      scf.yield %129, %140, %144 : vector<8x1xf32>, vector<8x1xf32>, vector<8x8xf32>
    }
    %87 = tpu.reciprocal %86#1 {approx = true} : vector<8x1xf32> -> vector<8x1xf32>
    %88 = vector.broadcast %87 : vector<8x1xf32> to vector<8x8xf32>
    %89 = arith.mulf %86#2, %88 : vector<8x8xf32>
    %90 = arith.truncf %89 : vector<8x8xf32> to vector<8x8xbf16>
    %c0_40 = arith.constant 0 : index
    %c16 = arith.constant 16 : index
    %91 = vector.load %arg10[%c0_40, %c16] : memref<8x32xbf16, #tpu.memory_space<vmem>>, vector<8x8xbf16>
    tpu.vector_store %arg10[%c0_40, %c16], %90 {strides = array<i32>} : memref<8x32xbf16, #tpu.memory_space<vmem>>, vector<8x8xbf16>,
    %92 = vector.extract_strided_slice %52 {offsets = [0, 24], sizes = [8, 8], strides = [1, 1]} : vector<8x32xbf16> to vector<8x8xbf16>
    %cst_41 = arith.constant -1.000000e+30 : f32
    %93 = vector.broadcast %cst_41 : f32 to vector<8x1xf32>
    %cst_42 = arith.constant 0.000000e+00 : f32
    %94 = vector.broadcast %cst_42 : f32 to vector<8x1xf32>
    %cst_43 = arith.constant 0.000000e+00 : f32
    %95 = vector.broadcast %cst_43 : f32 to vector<8x8xf32>
    %c1_i32_44 = arith.constant 1 : i32
    %96 = arith.addi %arg1, %c1_i32_44 : i32
    %c0_i32_45 = arith.constant 0 : i32
    %97 = arith.subi %96, %c0_i32_45 : i32
    %98 = arith.addi %c0_i32_45, %97 : i32
    %c1_i32_46 = arith.constant 1 : i32
    %99:3 = scf.for %arg11 = %c0_i32_45 to %98 step %c1_i32_46 iter_args(%arg12 = %93, %arg13 = %94, %arg14 = %95) -> (vector<8x1xf32>, vector<8x1xf32>, vector<8x8xf32>)  : i32 {
      %c8_i32_56 = arith.constant 8 : i32
      %111 = arith.muli %arg11, %c8_i32_56 : i32
      %112 = tpu.assume_multiple %111, 8 : i32
      %113 = arith.index_cast %112 : i32 to index
      %c24_57 = arith.constant 24 : index
      %114 = vector.load %arg8[%113, %c24_57] : memref<8x32xbf16, #tpu.memory_space<vmem>>, vector<8x8xbf16>
      %115 = arith.index_cast %112 : i32 to index
      %c24_58 = arith.constant 24 : index
      %116 = vector.load %arg9[%115, %c24_58] : memref<8x32xbf16, #tpu.memory_space<vmem>>, vector<8x8xbf16>
      %cst_59 = arith.constant dense<0.000000e+00> : vector<8x8xf32>
      %117 = tpu.matmul %92, %114, %cst_59 {dimension_numbers = #tpu.dot_dimension_numbers<[1], [1], [0], [0], [0, 0, 1, 0], [], []>} : vector<8x8xbf16>, vector<8x8xbf16>, vector<8x8xf32> -> vector<8x8xf32>
      %118 = tpu.iota {dimensions = array<i32: 0>} : vector<8x8xi32>
      %119 = vector.broadcast %1 : i32 to vector<8x8xi32>
      %120 = arith.addi %119, %118 : vector<8x8xi32>
      %121 = tpu.iota {dimensions = array<i32: 1>} : vector<8x8xi32>
      %122 = vector.broadcast %112 : i32 to vector<8x8xi32>
      %123 = arith.addi %122, %121 : vector<8x8xi32>
      %124 = arith.cmpi sge, %120, %123 : vector<8x8xi32>
      %cst_60 = arith.constant -1.000000e+30 : f32
      %125 = vector.broadcast %cst_60 : f32 to vector<8x8xf32>
      %126 = arith.select %124, %117, %125 : vector<8x8xi1>, vector<8x8xf32>
      %cst_61 = arith.constant dense<0xFF800000> : vector<8xf32>
      %127 = vector.multi_reduction <maximumf>, %126, %cst_61 [1] : vector<8x8xf32> to vector<8xf32>
      %128 = vector.shape_cast %127 : vector<8xf32> to vector<8x1xf32>
      %129 = arith.maximumf %arg12, %128 : vector<8x1xf32>
      %130 = arith.subf %arg12, %129 : vector<8x1xf32>
      %131 = math.exp %130 : vector<8x1xf32>
      %132 = vector.broadcast %129 : vector<8x1xf32> to vector<8x8xf32>
      %133 = arith.subf %126, %132 : vector<8x8xf32>
      %134 = arith.truncf %133 : vector<8x8xf32> to vector<8x8xbf16>
      %135 = math.exp %134 : vector<8x8xbf16>
      %136 = arith.mulf %131, %arg13 : vector<8x1xf32>
      %137 = arith.extf %135 : vector<8x8xbf16> to vector<8x8xf32>
      %cst_62 = arith.constant dense<0.000000e+00> : vector<8xf32>
      %138 = vector.multi_reduction <add>, %137, %cst_62 [1] : vector<8x8xf32> to vector<8xf32>
      %139 = vector.shape_cast %138 : vector<8xf32> to vector<8x1xf32>
      %140 = arith.addf %136, %139 : vector<8x1xf32>
      %141 = vector.broadcast %131 : vector<8x1xf32> to vector<8x8xf32>
      %142 = arith.mulf %141, %arg14 : vector<8x8xf32>
      %cst_63 = arith.constant dense<0.000000e+00> : vector<8x8xf32>
      %143 = tpu.matmul %135, %116, %cst_63 {dimension_numbers = #tpu.dot_dimension_numbers<[1], [0], [0], [1], [0, 0, 1, 1], [], []>} : vector<8x8xbf16>, vector<8x8xbf16>, vector<8x8xf32> -> vector<8x8xf32>
      %144 = arith.addf %142, %143 : vector<8x8xf32>
      scf.yield %129, %140, %144 : vector<8x1xf32>, vector<8x1xf32>, vector<8x8xf32>
    }
    %100 = tpu.reciprocal %99#1 {approx = true} : vector<8x1xf32> -> vector<8x1xf32>
    %101 = vector.broadcast %100 : vector<8x1xf32> to vector<8x8xf32>
    %102 = arith.mulf %99#2, %101 : vector<8x8xf32>
    %103 = arith.truncf %102 : vector<8x8xf32> to vector<8x8xbf16>
    %c0_47 = arith.constant 0 : index
    %c24 = arith.constant 24 : index
    %104 = vector.load %arg10[%c0_47, %c24] : memref<8x32xbf16, #tpu.memory_space<vmem>>, vector<8x8xbf16>
    tpu.vector_store %arg10[%c0_47, %c24], %103 {strides = array<i32>} : memref<8x32xbf16, #tpu.memory_space<vmem>>, vector<8x8xbf16>,
    %c0_48 = arith.constant 0 : index
    %c0_49 = arith.constant 0 : index
    %105 = vector.load %arg10[%c0_48, %c0_49] : memref<8x32xbf16, #tpu.memory_space<vmem>>, vector<8x32xbf16>
    %c0_50 = arith.constant 0 : index
    %c0_51 = arith.constant 0 : index
    %106 = vector.load %arg4[%c0_50, %c0_51] : memref<32x32xbf16, #tpu.memory_space<vmem>>, vector<32x32xbf16>
    %cst_52 = arith.constant dense<0.000000e+00> : vector<8x32xf32>
    %107 = tpu.matmul %105, %106, %cst_52 {dimension_numbers = #tpu.dot_dimension_numbers<[1], [0], [0], [1], [0, 0, 1, 1], [], []>} : vector<8x32xbf16>, vector<32x32xbf16>, vector<8x32xf32> -> vector<8x32xf32>
    %c0_53 = arith.constant 0 : index
    %c0_54 = arith.constant 0 : index
    %c0_55 = arith.constant 0 : index
    %108 = vector.load %arg7[%c0_53, %c0_54, %c0_55] : memref<1x8x32xf32, #tpu.memory_space<vmem>>, vector<1x8x32xf32>
    %109 = vector.shape_cast %108 : vector<1x8x32xf32> to vector<8x32xf32>
    %110 = vector.shape_cast %107 : vector<8x32xf32> to vector<1x8x32xf32>
    tpu.vector_store %arg7[%c0_53, %c0_54, %c0_55], %110 {strides = array<i32>} : memref<1x8x32xf32, #tpu.memory_space<vmem>>, vector<1x8x32xf32>,
    return
  }
  func.func @transform_0(%arg0: i32, %arg1: i32) -> (i32, i32, i32) {
    %c0_i32 = arith.constant 0 : i32
    %c0_i32_0 = arith.constant 0 : i32
    return %arg0, %arg1, %c0_i32 : i32, i32, i32
  }
  func.func @transform_1(%arg0: i32, %arg1: i32) -> (i32, i32) {
    %c0_i32 = arith.constant 0 : i32
    %c0_i32_0 = arith.constant 0 : i32
    %c0_i32_1 = arith.constant 0 : i32
    return %c0_i32, %c0_i32_0 : i32, i32
  }
  func.func @transform_2(%arg0: i32, %arg1: i32) -> (i32, i32) {
    %c0_i32 = arith.constant 0 : i32
    %c0_i32_0 = arith.constant 0 : i32
    %c0_i32_1 = arith.constant 0 : i32
    return %c0_i32, %c0_i32_0 : i32, i32
  }
  func.func @transform_3(%arg0: i32, %arg1: i32) -> (i32, i32) {
    %c0_i32 = arith.constant 0 : i32
    %c0_i32_0 = arith.constant 0 : i32
    return %arg1, %c0_i32 : i32, i32
  }
  func.func @transform_4(%arg0: i32, %arg1: i32) -> (i32, i32) {
    %c0_i32 = arith.constant 0 : i32
    %c0_i32_0 = arith.constant 0 : i32
    return %arg1, %c0_i32 : i32, i32
  }
  func.func @transform_5(%arg0: i32, %arg1: i32) -> (i32, i32, i32) {
    %c0_i32 = arith.constant 0 : i32
    %c0_i32_0 = arith.constant 0 : i32
    return %arg0, %arg1, %c0_i32 : i32, i32, i32
  }
}

</mosaic_0001>

<llo_original>
// kernel: tpu_custom_call.1
$region0: #{tpu_custom_call.1}
  #allocation0 [shape = 'u32[]', space=smem, size = 0x4, offset = 0x4, fixed_abs, tag = 'smem constant byte address 0x4 - core index']
  #allocation1 [shape = 'u32[144,128]{1,0:T(1,128)}', space=vmem, size = 0x12000, scoped, tag = 'internal scratch']
  #allocation2 [shape = 'bf16[8,32]{1,0:T(8,128)(2,1)}', space=vmem, size = 0x800, scoped, tag = 'scratch operand']
  #allocation3 [shape = 'bf16[8,32]{1,0:T(8,128)(2,1)}', space=vmem, size = 0x800, scoped, tag = 'scratch operand']
  #allocation4 [shape = 'bf16[8,32]{1,0:T(8,128)(2,1)}', space=vmem, size = 0x800, scoped, tag = 'scratch operand']
  %s0 = inlined_call_operand.hbm [shape: bf16[2,8,32], index: 0, kind: input, shape index: {}]
  %s1 = inlined_call_operand.hbm [shape: bf16[32,96], index: 1, kind: input, shape index: {}]
  %s2 = inlined_call_operand.hbm [shape: bf16[32,32], index: 2, kind: input, shape index: {}]
  %s3 = inlined_call_operand.vmem [shape: f32[8,32], index: 3, kind: input, shape index: {}]
  %s4 = inlined_call_operand.hbm [shape: f32[8,32], index: 4, kind: input, shape index: {}]
  %s5 = inlined_call_operand.hbm [shape: f32[2,8,32], index: 5, kind: output, shape index: {}]
  %s6 = sld [smem:[#allocation0]]
  $region97: #{tpu_custom_call.1} parent=0
    _
  %s8 = ssub.s32 1, %s6
  %s9 = scalar_select 0, %s8, %s6
  $region1: #{tpu_custom_call.1} parent=0
    #allocation5 [shape = 'u8[4096]{0}', space=vmem, size = 0x1000, scoped, tag = 'input window, operand 0']
    #allocation6 [shape = 's32[2]{0}', space=sflag, size = 0x8, scoped, tag = 'scoped memory for tpu_custom_call.1']
    #allocation7 [shape = 's32[2]{0}', space=sflag, size = 0x8, scoped, tag = 'scoped memory for tpu_custom_call.1']
    #allocation8 [shape = 'u8[8192]{0}', space=vmem, size = 0x2000, scoped, tag = 'input window, operand 1, single buffered']
    #allocation9 [shape = 's32[1]{0}', space=sflag, size = 0x4, scoped, tag = 'scoped memory for tpu_custom_call.1']
    #allocation10 [shape = 'u8[8192]{0}', space=vmem, size = 0x2000, scoped, tag = 'input window, operand 2, single buffered']
    #allocation11 [shape = 'u8[4096]{0}', space=vmem, size = 0x1000, scoped, tag = 'input window, operand 4, single buffered']
    #allocation12 [shape = 's32[1]{0}', space=sflag, size = 0x4, scoped, tag = 'scoped memory for tpu_custom_call.1']
    #allocation13 [shape = 'u8[8192]{0}', space=vmem, size = 0x2000, scoped, tag = 'output window, operand 0']
    %10 = vsyncpa [#allocation6], 0
    %s11 = scalar_lea.sflag [#allocation6], 1
    %12 = vsyncpa %s11, 0
    %13 = vsyncpa [#allocation9], 0
    %14 = vsyncpa [#allocation12], 0
    %15 = vsyncpa [#allocation7], 0
    %s16 = scalar_lea.sflag [#allocation7], 1
    %17 = vsyncpa %s16, 0
    loop: start=0, step=1, limit=4
    $region2: #{tpu_custom_call.1} parent=1 // loop_pre_header
      _
    $region3: #{tpu_custom_call.1} parent=1 // loop_header
      %s19 = sphi 0, %s23
      %p20 = scmp.ge.s32.totalorder %s19, 4
      %s26 = sphi 0, %s38
      %s27 = sphi 0, %s34
      %s28 = sphi 0, %s26
      %s29 = sphi 0, %s27
      %s30 = sphi 0, %s28
      %s31 = sphi 0, %s29
      %s43 = sphi 0, %s45
      %s46 = sphi 0, %s43
      %s47 = sphi 0, %s46
      %s63 = sphi 0, %s47
      %s67 = sphi 0, %s67
      %s69 = sphi 0, %s67
      %s70 = sphi 0, %s69
      %s84 = sphi 0, %s70
      %s88 = sphi 0, %s88
      %s90 = sphi 0, %s88
      %s91 = sphi 0, %s90
      %s105 = sphi 0, %s91
      %s111 = sphi 0, %s113
      %s114 = sphi 0, %s111
      %s115 = sphi 0, %s114
      %s131 = sphi 0, %s115
      %s137 = sphi 0, %s139
      %s140 = sphi 0, %s137
      %s141 = sphi 0, %s140
      %s157 = sphi 0, %s141
      %s165 = sphi 0, %s167
      %s168 = sphi 0, %s165
      %s169 = sphi 0, %s168
      %s185 = sphi 0, %s169
    $region4: #{tpu_custom_call.1} parent=1 // loop_header_branch
      %22 = sbr.rel (%p20) target = $region8
    $region5: #{tpu_custom_call.1} parent=1 // loop_body
      %s24 = ssub.s32 %s19, 1
      %s25 = ssub.s32 %s19, 2
      %s32 = sadd.s32 1, %s27
      %p33 = scmp.ge.s32.totalorder %s32, 1
      %s34 = scalar_select %p33, 0, %s32
      %s35 = sadd.s32 1, %s26
      %s36 = scalar_select %p33, %s35, %s26
      %p37 = scmp.ge.s32.totalorder %s36, 2
      %s38 = scalar_select %p37, 0, %s36
      %s39 = ssub.s32 %s26, %s38
      %s40 = ssub.s32 %s27, %s34
      %s41 = sor.u32 %s39, %s40
      %p42 = scmp.eq.s32.totalorder %s41, 0
      %s44 = sadd.s32 %s43, 1
      %s45 = scalar_select %p42, %s43, %s44
      %p48 = pneg %p42
      %p49 = scmp.eq.s32.totalorder %s19, 1
      %p50 = por %p48, %p49
      %p51 = scmp.ne.s32.totalorder %s43, %s46
      %p52 = scmp.eq.s32.totalorder %s19, 0
      %p53 = por %p51, %p52
      %p54 = scmp.ne.s32.totalorder %s43, %s46
      %p55 = scmp.eq.s32.totalorder %s24, 1
      %p56 = por %p54, %p55
      %p57 = scmp.ne.s32.totalorder %s46, %s47
      %p58 = scmp.eq.s32.totalorder %s24, 0
      %p59 = por %p57, %p58
      %p60 = scmp.ne.s32.totalorder %s46, %s47
      %p61 = scmp.eq.s32.totalorder %s25, 1
      %p62 = por %p60, %p61
      %p64 = scmp.ne.s32.totalorder %s47, %s63
      %p65 = scmp.eq.s32.totalorder %s25, 0
      %p66 = por %p64, %p65
      %s68 = sadd.s32 %s67, 1
      %p71 = scmp.eq.s32.totalorder %s19, 1
      %p72 = scmp.ne.s32.totalorder %s67, %s69
      %p73 = scmp.eq.s32.totalorder %s19, 0
      %p74 = por %p72, %p73
      %p75 = scmp.ne.s32.totalorder %s67, %s69
      %p76 = scmp.eq.s32.totalorder %s24, 1
      %p77 = por %p75, %p76
      %p78 = scmp.ne.s32.totalorder %s69, %s70
      %p79 = scmp.eq.s32.totalorder %s24, 0
      %p80 = por %p78, %p79
      %p81 = scmp.ne.s32.totalorder %s69, %s70
      %p82 = scmp.eq.s32.totalorder %s25, 1
      %p83 = por %p81, %p82
      %p85 = scmp.ne.s32.totalorder %s70, %s84
      %p86 = scmp.eq.s32.totalorder %s25, 0
      %p87 = por %p85, %p86
      %s89 = sadd.s32 %s88, 1
      %p92 = scmp.eq.s32.totalorder %s19, 1
      %p93 = scmp.ne.s32.totalorder %s88, %s90
      %p94 = scmp.eq.s32.totalorder %s19, 0
      %p95 = por %p93, %p94
      %p96 = scmp.ne.s32.totalorder %s88, %s90
      %p97 = scmp.eq.s32.totalorder %s24, 1
      %p98 = por %p96, %p97
      %p99 = scmp.ne.s32.totalorder %s90, %s91
      %p100 = scmp.eq.s32.totalorder %s24, 0
      %p101 = por %p99, %p100
      %p102 = scmp.ne.s32.totalorder %s90, %s91
      %p103 = scmp.eq.s32.totalorder %s25, 1
      %p104 = por %p102, %p103
      %p106 = scmp.ne.s32.totalorder %s91, %s105
      %p107 = scmp.eq.s32.totalorder %s25, 0
      %p108 = por %p106, %p107
      %s109 = ssub.s32 %s27, %s34
      %p110 = scmp.eq.s32.totalorder %s109, 0
      %s112 = sadd.s32 %s111, 1
      %s113 = scalar_select %p110, %s111, %s112
      %p116 = pneg %p110
      %p117 = scmp.eq.s32.totalorder %s19, 1
      %p118 = por %p116, %p117
      %p119 = scmp.ne.s32.totalorder %s111, %s114
      %p120 = scmp.eq.s32.totalorder %s19, 0
      %p121 = por %p119, %p120
      %p122 = scmp.ne.s32.totalorder %s111, %s114
      %p123 = scmp.eq.s32.totalorder %s24, 1
      %p124 = por %p122, %p123
      %p125 = scmp.ne.s32.totalorder %s114, %s115
      %p126 = scmp.eq.s32.totalorder %s24, 0
      %p127 = por %p125, %p126
      %p128 = scmp.ne.s32.totalorder %s114, %s115
      %p129 = scmp.eq.s32.totalorder %s25, 1
      %p130 = por %p128, %p129
      %p132 = scmp.ne.s32.totalorder %s115, %s131
      %p133 = scmp.eq.s32.totalorder %s25, 0
      %p134 = por %p132, %p133
      %s135 = ssub.s32 %s27, %s34
      %p136 = scmp.eq.s32.totalorder %s135, 0
      %s138 = sadd.s32 %s137, 1
      %s139 = scalar_select %p136, %s137, %s138
      %p142 = pneg %p136
      %p143 = scmp.eq.s32.totalorder %s19, 1
      %p144 = por %p142, %p143
      %p145 = scmp.ne.s32.totalorder %s137, %s140
      %p146 = scmp.eq.s32.totalorder %s19, 0
      %p147 = por %p145, %p146
      %p148 = scmp.ne.s32.totalorder %s137, %s140
      %p149 = scmp.eq.s32.totalorder %s24, 1
      %p150 = por %p148, %p149
      %p151 = scmp.ne.s32.totalorder %s140, %s141
      %p152 = scmp.eq.s32.totalorder %s24, 0
      %p153 = por %p151, %p152
      %p154 = scmp.ne.s32.totalorder %s140, %s141
      %p155 = scmp.eq.s32.totalorder %s25, 1
      %p156 = por %p154, %p155
      %p158 = scmp.ne.s32.totalorder %s141, %s157
      %p159 = scmp.eq.s32.totalorder %s25, 0
      %p160 = por %p158, %p159
      %s161 = ssub.s32 %s26, %s38
      %s162 = ssub.s32 %s27, %s34
      %s163 = sor.u32 %s161, %s162
      %p164 = scmp.eq.s32.totalorder %s163, 0
      %s166 = sadd.s32 %s165, 1
      %s167 = scalar_select %p164, %s165, %s166
      %p170 = pneg %p164
      %p171 = scmp.eq.s32.totalorder %s19, 1
      %p172 = por %p170, %p171
      %p173 = scmp.ne.s32.totalorder %s165, %s168
      %p174 = scmp.eq.s32.totalorder %s19, 0
      %p175 = por %p173, %p174
      %p176 = scmp.ne.s32.totalorder %s165, %s168
      %p177 = scmp.eq.s32.totalorder %s24, 1
      %p178 = por %p176, %p177
      %p179 = scmp.ne.s32.totalorder %s168, %s169
      %p180 = scmp.eq.s32.totalorder %s24, 0
      %p181 = por %p179, %p180
      %p182 = scmp.ne.s32.totalorder %s168, %s169
      %p183 = scmp.eq.s32.totalorder %s25, 1
      %p184 = por %p182, %p183
      %p186 = scmp.ne.s32.totalorder %s169, %s185
      %p187 = scmp.eq.s32.totalorder %s25, 0
      %p188 = por %p186, %p187
      %p189 = scmp.le.s32.totalorder 1, %s19
      %p190 = scmp.lt.s32.totalorder %s19, 3
      %p191 = pnand %p189, %p190
      %p192 = pneg %p191
      // Predicated region
      $region9: #{tpu_custom_call.1} parent=5 // pred_check
        _
      $region10: #{tpu_custom_call.1} parent=5 // pred_check_branch
        %194 = sbr.rel (%p191) target = $region12
      $region11: #{tpu_custom_call.1} parent=5 // pred_region
        %s195 = ssub.s32 %s19, 1
        // Predicated region
        $region13: #{tpu_custom_call.1} parent=11 // pred_check
          %p196 = pneg %p80
        $region14: #{tpu_custom_call.1} parent=11 // pred_check_branch
          %198 = sbr.rel (%p196) target = $region16
        $region15: #{tpu_custom_call.1} parent=11 // pred_region
          %s200 = ssub.s32 256, 256
          %201 = vsyncadd [#allocation9], %s200
          %s202 = sshll.u32 [#allocation8], 4
          %s203 = int_to_ptr.vmem [resolvable:$true] %s202
          %208 = dma.hbm_to_vmem [thread:$0]  %s1, 256, %s203, [#allocation9], 64, 64, 4
        $region16: #{tpu_custom_call.1} parent=11 // pred_fallthru
          _
        // Predicated region
        $region17: #{tpu_custom_call.1} parent=11 // pred_check
          %p209 = pneg %p101
        $region18: #{tpu_custom_call.1} parent=11 // pred_check_branch
          %211 = sbr.rel (%p209) target = $region20
        $region19: #{tpu_custom_call.1} parent=11 // pred_region
          %s213 = ssub.s32 256, 256
          %214 = vsyncadd [#allocation9], %s213
          %s215 = sshll.u32 [#allocation10], 4
          %s216 = int_to_ptr.vmem [resolvable:$true] %s215
          %221 = dma.hbm_to_vmem [thread:$0]  %s2, 256, %s216, [#allocation9], 64, 64, 4
        $region20: #{tpu_custom_call.1} parent=11 // pred_fallthru
          _
        // Predicated region
        $region21: #{tpu_custom_call.1} parent=11 // pred_check
          %p222 = pneg %p127
        $region22: #{tpu_custom_call.1} parent=11 // pred_check_branch
          %224 = sbr.rel (%p222) target = $region24
        $region23: #{tpu_custom_call.1} parent=11 // pred_region
          %p225 = scmp.lt.s32.totalorder %s29, 0
          %s226 = scalar_select %p225, %s29, 0
          %s227 = smul.addr %s226, 8
          %s228 = scalar_lea.vmem %s3, %s227
        $region24: #{tpu_custom_call.1} parent=11 // pred_fallthru
          _
        // Predicated region
        $region25: #{tpu_custom_call.1} parent=11 // pred_check
          %p229 = pneg %p153
        $region26: #{tpu_custom_call.1} parent=11 // pred_check_branch
          %231 = sbr.rel (%p229) target = $region28
        $region27: #{tpu_custom_call.1} parent=11 // pred_region
          %s233 = ssub.s32 128, 128
          %234 = vsyncadd [#allocation12], %s233
          %s235 = smul.addr %s29, 128
          %s236 = scalar_lea.hbm %s4, %s235
          %s238 = sshll.u32 [#allocation11], 4
          %s239 = int_to_ptr.vmem [resolvable:$true] %s238
          %241 = dma.hbm_to_vmem [thread:$0]  %s236, 128, %s239, [#allocation12]
        $region28: #{tpu_custom_call.1} parent=11 // pred_fallthru
          _
      $region12: #{tpu_custom_call.1} parent=5 // pred_fallthru
        _
      %p242 = scmp.lt.s32.totalorder %s19, 2
      // Predicated region
      $region29: #{tpu_custom_call.1} parent=5 // pred_check
        %p243 = pneg %p242
      $region30: #{tpu_custom_call.1} parent=5 // pred_check_branch
        %245 = sbr.rel (%p243) target = $region32
      $region31: #{tpu_custom_call.1} parent=5 // pred_region
        // Predicated region
        $region33: #{tpu_custom_call.1} parent=31 // pred_check
          %p246 = pneg %p53
        $region34: #{tpu_custom_call.1} parent=31 // pred_check_branch
          %248 = sbr.rel (%p246) target = $region36
        $region35: #{tpu_custom_call.1} parent=31 // pred_region
          %s249 = sand.u32 %s43, 1
          %s250 = scalar_lea.sflag [#allocation6], %s249
          %s251 = sand.u32 %s43, 1
          %s252 = smul.addr %s251, 4
          %s253 = scalar_lea.vmem [#allocation5], %s252
          %s255 = ssub.s32 64, 64
          %256 = vsyncadd %s250, %s255
          %s257 = sadd.s32 %s27, %s26
          %s258 = smul.addr %s257, 64
          %s259 = scalar_lea.hbm %s0, %s258
          %s261 = sshll.u32 %s253, 4
          %s262 = int_to_ptr.vmem [resolvable:$true] %s261
          %264 = dma.hbm_to_vmem [thread:$0]  %s259, 64, %s262, %s250
        $region36: #{tpu_custom_call.1} parent=31 // pred_fallthru
          _
      $region32: #{tpu_custom_call.1} parent=5 // pred_fallthru
        _
      %p265 = scmp.le.s32.totalorder 1, %s19
      %p266 = scmp.lt.s32.totalorder %s19, 3
      %p267 = pnand %p265, %p266
      %p268 = pneg %p267
      // Predicated region
      $region37: #{tpu_custom_call.1} parent=5 // pred_check
        _
      $region38: #{tpu_custom_call.1} parent=5 // pred_check_branch
        %270 = sbr.rel (%p267) target = $region40
      $region39: #{tpu_custom_call.1} parent=5 // pred_region
        %s271 = ssub.s32 %s19, 1
        %s272 = sand.u32 %s46, 1
        %s273 = scalar_lea.sflag [#allocation6], %s272
        %s274 = sand.u32 %s46, 1
        %s275 = smul.addr %s274, 4
        %s276 = scalar_lea.vmem [#allocation5], %s275
        // Predicated region
        $region41: #{tpu_custom_call.1} parent=39 // pred_check
          %p277 = pneg %p59
        $region42: #{tpu_custom_call.1} parent=39 // pred_check_branch
          %279 = sbr.rel (%p277) target = $region44
        $region43: #{tpu_custom_call.1} parent=39 // pred_region
          %280 = dma.done %s273, 64
        $region44: #{tpu_custom_call.1} parent=39 // pred_fallthru
          _
        // Predicated region
        $region45: #{tpu_custom_call.1} parent=39 // pred_check
          %p281 = pneg %p80
        $region46: #{tpu_custom_call.1} parent=39 // pred_check_branch
          %283 = sbr.rel (%p281) target = $region48
        $region47: #{tpu_custom_call.1} parent=39 // pred_region
          %284 = dma.done [#allocation9], 256
        $region48: #{tpu_custom_call.1} parent=39 // pred_fallthru
          _
        // Predicated region
        $region49: #{tpu_custom_call.1} parent=39 // pred_check
          %p285 = pneg %p101
        $region50: #{tpu_custom_call.1} parent=39 // pred_check_branch
          %287 = sbr.rel (%p285) target = $region52
        $region51: #{tpu_custom_call.1} parent=39 // pred_region
          %288 = dma.done [#allocation9], 256
        $region52: #{tpu_custom_call.1} parent=39 // pred_fallthru
          _
        // Predicated region
        $region53: #{tpu_custom_call.1} parent=39 // pred_check
          %p289 = pneg %p153
        $region54: #{tpu_custom_call.1} parent=39 // pred_check_branch
          %291 = sbr.rel (%p289) target = $region56
        $region55: #{tpu_custom_call.1} parent=39 // pred_region
          %292 = dma.done [#allocation12], 128
        $region56: #{tpu_custom_call.1} parent=39 // pred_fallthru
          _
        %s293 = sand.u32 %s46, 1
        %s294 = scalar_lea.sflag [#allocation6], %s293
        %s295 = sand.u32 %s46, 1
        %s296 = smul.addr %s295, 4
        %s297 = scalar_lea.vmem [#allocation5], %s296
        %p298 = pneg %p59
        %p299 = pneg %p56
        %p300 = pneg %p80
        %p301 = pneg %p77
        %p302 = pneg %p101
        %p303 = pneg %p98
        %p304 = scmp.lt.s32.totalorder %s29, 0
        %s305 = scalar_select %p304, %s29, 0
        %s306 = smul.addr %s305, 8
        %s307 = scalar_lea.vmem %s3, %s306
        %p308 = pneg %p127
        %p309 = pneg %p124
        %p310 = pneg %p153
        %p311 = pneg %p150
        %p312 = pneg %p181
        %p313 = pneg %p178
        %s314 = sand.u32 %s168, 1
        %s315 = scalar_lea.sflag [#allocation7], %s314
        %s316 = sand.u32 %s168, 1
        %s317 = smul.addr %s316, 8
        %s318 = scalar_lea.vmem [#allocation13], %s317
        %p319 = scmp.lt.s32.totalorder %s29, 0
        %s320 = scalar_select %p319, %s29, 0
        %s321 = smul.addr %s320, 8
        %s322 = scalar_lea.vmem %s3, %s321
        %s324 = smul.u32 %s29, 8
        %v325 = vld [vmem:[%s276] sm:$0xf]
        %v326 = vld [vmem:[#allocation8] sm:$0xf]
        %v327 = vld [vmem:[#allocation8 + $0x4] sm:$0xf]
        %v328 = vld [vmem:[#allocation8 + $0x8] sm:$0xf]
        %v329 = vld [vmem:[#allocation8 + $0xc] sm:$0xf]
        %v334 = vunpack.c.l.b16 %v326
        %v335 = vunpack.c.l.b16 %v327
        %v336 = vunpack.c.l.b16 %v328
        %v337 = vunpack.c.l.b16 %v329
        %v338 = vpack.c.b16 %v335, %v334
        %v339 = vpack.c.b16 %v337, %v336
        %vm342 = vcmask 261120
        %v344 = vsel %vm342, %v325, 0
        %346 = vmatprep.subr.bf16.mxu0 0
        %347 = vmatpush1.bf16.msra.mxu0 %v338
        %348 = vmatprep.subr.bf16.mxu0 0
        %349 = vmatpush1.bf16.msra.mxu0 %v339
        %350 = vmatprep.subr.bf16.mxu0 0
        %351 = vmatpush1.bf16.msra.mxu0 0
        %352 = vmatprep.subr.bf16.mxu0 0
        %353 = vmatpush1.bf16.msra.mxu0 0
        %354 = vmatprep.subr.bf16.mxu0 0
        %355 = vmatpush1.bf16.msra.mxu0 0
        %356 = vmatprep.subr.bf16.mxu0 0
        %357 = vmatpush1.bf16.msra.mxu0 0
        %358 = vmatprep.subr.bf16.mxu0 0
        %359 = vmatpush1.bf16.msra.mxu0 0
        %360 = vmatprep.subr.bf16.mxu0 0
        %361 = vmatpush1.bf16.msra.mxu0 0
        %362 = vmatprep.subr.bf16.mxu0 0
        %363 = vmatpush1.bf16.msra.mxu0 0
        %364 = vmatprep.subr.bf16.mxu0 0
        %365 = vmatpush1.bf16.msra.mxu0 0
        %366 = vmatprep.subr.bf16.mxu0 0
        %367 = vmatpush1.bf16.msra.mxu0 0
        %368 = vmatprep.subr.bf16.mxu0 0
        %369 = vmatpush1.bf16.msra.mxu0 0
        %370 = vmatprep.subr.bf16.mxu0 0
        %371 = vmatpush1.bf16.msra.mxu0 0
        %372 = vmatprep.subr.bf16.mxu0 0
        %373 = vmatpush1.bf16.msra.mxu0 0
        %374 = vmatprep.subr.bf16.mxu0 0
        %375 = vmatpush1.bf16.msra.mxu0 0
        %376 = vmatprep.subr.bf16.mxu0 0
        %377 = vmatpush1.bf16.msra.mxu0 0
        %378 = vmatprep.mubr.bf16.mxu0 0
        %379 = vmatmul.mubr.bf16.gmra.mrb[0].mxu0 %v344
        %v380 = vpop.f32.mrb[0].mxu0
        %v381 = vadd.f32 0.0, %v380
        %v382 = vpop.f32.mrb[0].mxu0
        %v383 = vpop.f32.mrb[0].mxu0
        %v384 = vpop.f32.mrb[0].mxu0
        %385 = vdwg.mxu0
        %v386 = vld [vmem:[%s322] sm:$0xff]
        %v387 = vld [vmem:[#allocation11] sm:$0xff]
        %v388 = vlaneseq
        %v389 = vand.u32 %v388, 127
        %vm390 = vcmp.lt.s32.totalorder %v389, 0
        %v391 = vsub.s32 0, %v389
        %v392 = vsel %vm390, %v391, %v389
        %v393 = vshrl.u32 %v392, 1
        %v394 = vand.u32 %v392, 1
        %v395 = vsub.s32 0, %v394
        %v396 = vsel %vm390, %v395, %v394
        %vm397 = vcmp.ne.s32.totalorder %v396, 0
        %vm398 = vcmp.lt.s32.totalorder %v396, 0
        %vm399 = vmand %vm398, %vm397
        %v400 = vadd.s32 %v396, 2
        %v401 = vsel %vm399, %v400, %v396
        %vm402 = vcmp.eq.s32.totalorder %v401, 0
        %v403 = vmul.f32 %v381, %v386
        %vm404 = vcmask 1047808
        %405 = vrot.lane.b32.xlu0 %v381, 32
        %v406 = vpop.permute.xlu0 %405
        %v407 = vsel %vm404, %v406, %v381
        %408 = vrot.lane.b32.xlu0 %v407, 32
        %v409 = vpop.permute.xlu0 %408
        %v410 = vsel %vm404, %v409, %v381
        %v411 = vsub.f32 0.0, %v410
        %413 = vrot.lane.b32.xlu0 %v411, 127
        %v414 = vpop.permute.xlu0 %413
        %417 = vrot.lane.b32.xlu0 %v410, 97
        %v418 = vpop.permute.xlu0 %417
        %v420 = vsel %vm402, %v414, %v418
        %v421 = vmul.f32 %v420, %v387
        %v422 = vadd.f32 %v403, %v421
        %424 = vrot.lane.b32.xlu0 %v386, 32
        %v425 = vpop.permute.xlu0 %424
        %v427 = vmul.f32 %v381, %v425
        %429 = vrot.lane.b32.xlu0 %v381, 96
        %v430 = vpop.permute.xlu0 %429
        %432 = vrot.lane.b32.xlu0 %v430, 32
        %v433 = vpop.permute.xlu0 %432
        %v434 = vsel %vm404, %v433, %v430
        %435 = vrot.lane.b32.xlu0 %v434, 32
        %v436 = vpop.permute.xlu0 %435
        %v437 = vsel %vm404, %v436, %v430
        %v438 = vsub.f32 0.0, %v437
        %440 = vrot.lane.b32.xlu0 %v438, 127
        %v441 = vpop.permute.xlu0 %440
        %444 = vrot.lane.b32.xlu0 %v437, 97
        %v445 = vpop.permute.xlu0 %444
        %v447 = vsel %vm402, %v441, %v445
        %v448 = vmul.f32 %v447, %v387
        %450 = vrot.lane.b32.xlu0 %v448, 32
        %v451 = vpop.permute.xlu0 %450
        %v453 = vadd.f32 %v427, %v451
        %v454 = vpack.c.bf16 %v453, %v453
        %v456 = vunpack.c.l.b16 %v454
        %v457 = vpack.c.b16 %v456, %v456
        %458 = vrot.lane.b32.xlu0 %v457, 96
        %v459 = vpop.permute.xlu0 %458
        %s461 = sshra.s32 %s324, 3
        %s462 = sand.u32 %s324, 7
        %s463 = smul.addr %s461, 4
        %s464 = scalar_lea.vmem [#allocation2], %s463
        %vm465 = vcmask 257024
        %466 = vst.msk [vmem:[%s464] sm:$0xf] %vm465, %v459
        %v467 = vpack.c.bf16 %v381, %v381
        %v469 = vunpack.c.l.b16 %v467
        %v470 = vpack.c.b16 %v469, %v469
        %471 = vrot.lane.b32.xlu0 %v470, 64
        %v472 = vpop.permute.xlu0 %471
        %s474 = smul.addr %s461, 4
        %s475 = scalar_lea.vmem [#allocation3], %s474
        %476 = vst.msk [vmem:[%s475] sm:$0xf] %vm465, %v472
        %v477 = vpack.c.bf16 %v422, %v422
        %s478 = sadd.s32 %s29, 1
        // While loop
        $region57: #{tpu_custom_call.1} parent=39 // loop_pre_header
          _
        $region58: #{tpu_custom_call.1} parent=39 // loop_header
          %s480 = sphi 0, %s482
          %p481 = scmp.ge.s32.totalorder %s480, %s478
          %v485 = vphi -1e+30, %v555
          %v486 = vphi 0.0, %v569
          %v487 = vphi 0.0, %v618
        $region59: #{tpu_custom_call.1} parent=39 // loop_header_branch
          %484 = sbr.rel (%p481) target = $region63
        $region60: #{tpu_custom_call.1} parent=39 // loop_body
          %s488 = smul.u32 %s480, 8
          %s489 = sshra.s32 %s488, 3
          %s490 = sand.u32 %s488, 7
          %s491 = smul.addr %s489, 4
          %s492 = scalar_lea.vmem [#allocation2], %s491
          %v493 = vld [vmem:[%s492] sm:$0xf]
          %s494 = smul.addr %s489, 4
          %s495 = scalar_lea.vmem [#allocation3], %s494
          %v496 = vld [vmem:[%s495] sm:$0xf]
          %vm497 = vcmask 64512
          %v499 = vsel %vm497, %v477, 0
          %v502 = vsel %vm497, %v493, 0
          %504 = vmatprep.subr.bf16.mxu0 0
          %505 = vmatpush1.bf16.xpose.msra.mxu0 %v502
          %506 = vmatprep.subr.bf16.mxu0 0
          %507 = vmatpush1.bf16.xpose.msra.mxu0 0
          %508 = vmatprep.subr.bf16.mxu0 0
          %509 = vmatpush1.bf16.xpose.msra.mxu0 0
          %510 = vmatprep.subr.bf16.mxu0 0
          %511 = vmatpush1.bf16.xpose.msra.mxu0 0
          %512 = vmatprep.subr.bf16.mxu0 0
          %513 = vmatpush1.bf16.xpose.msra.mxu0 0
          %514 = vmatprep.subr.bf16.mxu0 0
          %515 = vmatpush1.bf16.xpose.msra.mxu0 0
          %516 = vmatprep.subr.bf16.mxu0 0
          %517 = vmatpush1.bf16.xpose.msra.mxu0 0
          %518 = vmatprep.subr.bf16.mxu0 0
          %519 = vmatpush1.bf16.xpose.msra.mxu0 0
          %520 = vmatprep.subr.bf16.mxu0 0
          %521 = vmatpush1.bf16.xpose.msra.mxu0 0
          %522 = vmatprep.subr.bf16.mxu0 0
          %523 = vmatpush1.bf16.xpose.msra.mxu0 0
          %524 = vmatprep.subr.bf16.mxu0 0
          %525 = vmatpush1.bf16.xpose.msra.mxu0 0
          %526 = vmatprep.subr.bf16.mxu0 0
          %527 = vmatpush1.bf16.xpose.msra.mxu0 0
          %528 = vmatprep.subr.bf16.mxu0 0
          %529 = vmatpush1.bf16.xpose.msra.mxu0 0
          %530 = vmatprep.subr.bf16.mxu0 0
          %531 = vmatpush1.bf16.xpose.msra.mxu0 0
          %532 = vmatprep.subr.bf16.mxu0 0
          %533 = vmatpush1.bf16.xpose.msra.mxu0 0
          %534 = vmatprep.subr.bf16.mxu0 0
          %535 = vmatpush1.bf16.xpose.msra.mxu0 0
          %536 = vmatprep.mubr.bf16.mxu0 0
          %537 = vmatmul.mubr.bf16.gmra.mrb[0].mxu0 %v499
          %v538 = vpop.f32.mrb[0].mxu0
          %v539 = vadd.f32 0.0, %v538
          %v540 = vpop.f32.mrb[0].mxu0
          %v541 = vpop.f32.mrb[0].mxu0
          %v542 = vpop.f32.mrb[0].mxu0
          %543 = vdwg.mxu0
          %v544 = vlaneseq
          %v545 = vshrl.u32 %v544, 7
          %v546 = vstv %s324
          %v547 = vadd.s32 %v546, %v545
          %v548 = vstv %s488
          %v549 = vadd.s32 %v548, %v389
          %vm550 = vcmp.ge.s32.totalorder %v547, %v549
          %v551 = vsel %vm550, %v539, -1e+30
          %v552 = vsel %vm497, %v551, -inf
          %553 = vmax.xlane.f32.xlu0 %v552
          %v554 = vpop.xlane.xlu0 %553
          %v555 = vmax.f32 %v485, %v554
          %v556 = vsub.f32 %v485, %v555
          %v557 = vmul.f32 %v556, 1.442695
          %v558 = vpow.pop %v557
          %v559 = vsub.f32 %v551, %v555
          %v560 = vpack.c.bf16 %v559, %v559
          %v562 = vmul.bf16 %v560, 1069105081
          %v563 = vpow.bf16.pop %v562
          %v564 = vmul.f32 %v558, %v486
          %v565 = vunpack.c.l.bf16 %v563
          %v566 = vsel %vm497, %v565, 0.0
          %567 = vadd.xlane.f32.xlu0 %v566
          %v568 = vpop.xlane.xlu0 %567
          %v569 = vadd.f32 %v564, %v568
          %v570 = vmul.f32 %v558, %v487
          %v572 = vsel %vm497, %v563, 0
          %vm574 = vcmask 1043456
          %v576 = vsel %vm574, %v496, 0
          %578 = vmatprep.subr.bf16.mxu0 0
          %579 = vmatpush1.bf16.msra.mxu0 %v576
          %580 = vmatprep.subr.bf16.mxu0 0
          %581 = vmatpush1.bf16.msra.mxu0 0
          %582 = vmatprep.subr.bf16.mxu0 0
          %583 = vmatpush1.bf16.msra.mxu0 0
          %584 = vmatprep.subr.bf16.mxu0 0
          %585 = vmatpush1.bf16.msra.mxu0 0
          %586 = vmatprep.subr.bf16.mxu0 0
          %587 = vmatpush1.bf16.msra.mxu0 0
          %588 = vmatprep.subr.bf16.mxu0 0
          %589 = vmatpush1.bf16.msra.mxu0 0
          %590 = vmatprep.subr.bf16.mxu0 0
          %591 = vmatpush1.bf16.msra.mxu0 0
          %592 = vmatprep.subr.bf16.mxu0 0
          %593 = vmatpush1.bf16.msra.mxu0 0
          %594 = vmatprep.subr.bf16.mxu0 0
          %595 = vmatpush1.bf16.msra.mxu0 0
          %596 = vmatprep.subr.bf16.mxu0 0
          %597 = vmatpush1.bf16.msra.mxu0 0
          %598 = vmatprep.subr.bf16.mxu0 0
          %599 = vmatpush1.bf16.msra.mxu0 0
          %600 = vmatprep.subr.bf16.mxu0 0
          %601 = vmatpush1.bf16.msra.mxu0 0
          %602 = vmatprep.subr.bf16.mxu0 0
          %603 = vmatpush1.bf16.msra.mxu0 0
          %604 = vmatprep.subr.bf16.mxu0 0
          %605 = vmatpush1.bf16.msra.mxu0 0
          %606 = vmatprep.subr.bf16.mxu0 0
          %607 = vmatpush1.bf16.msra.mxu0 0
          %608 = vmatprep.subr.bf16.mxu0 0
          %609 = vmatpush1.bf16.msra.mxu0 0
          %610 = vmatprep.mubr.bf16.mxu0 0
          %611 = vmatmul.mubr.bf16.gmra.mrb[0].mxu0 %v572
          %v612 = vpop.f32.mrb[0].mxu0
          %v613 = vadd.f32 0.0, %v612
          %v614 = vpop.f32.mrb[0].mxu0
          %v615 = vpop.f32.mrb[0].mxu0
          %v616 = vpop.f32.mrb[0].mxu0
          %617 = vdwg.mxu0
          %v618 = vadd.f32 %v570, %v613
        $region61: #{tpu_custom_call.1} parent=39 // loop_footer
          %s482 = sadd.s32 %s480, 1
        $region62: #{tpu_custom_call.1} parent=39 // loop_footer_branch
          %479 = sbr.rel target = $region58
        $region63: #{tpu_custom_call.1} parent=39 // loop_exit
          _
        %v619 = vrcp.pop %v486
        %v620 = vmul.f32 %v487, %v619
        %v621 = vpack.c.bf16 %v620, %v620
        %vm622 = vcmask 60416
        %623 = vst.msk [vmem:[#allocation4] sm:$0xf] %vm622, %v621
        // While loop
        $region64: #{tpu_custom_call.1} parent=39 // loop_pre_header
          _
        $region65: #{tpu_custom_call.1} parent=39 // loop_header
          %s625 = sphi 0, %s627
          %p626 = scmp.ge.s32.totalorder %s625, %s478
          %v630 = vphi -1e+30, %v708
          %v631 = vphi 0.0, %v722
          %v632 = vphi 0.0, %v776
        $region66: #{tpu_custom_call.1} parent=39 // loop_header_branch
          %629 = sbr.rel (%p626) target = $region70
        $region67: #{tpu_custom_call.1} parent=39 // loop_body
          %s633 = smul.u32 %s625, 8
          %s634 = sshra.s32 %s633, 3
          %s635 = sand.u32 %s633, 7
          %s636 = smul.addr %s634, 4
          %s637 = scalar_lea.vmem [#allocation2], %s636
          %v638 = vld [vmem:[%s637] sm:$0xf]
          %s639 = smul.addr %s634, 4
          %s640 = scalar_lea.vmem [#allocation3], %s639
          %v641 = vld [vmem:[%s640] sm:$0xf]
          %643 = vrot.lane.b32.xlu0 %v477, 120
          %v644 = vpop.permute.xlu0 %643
          %v646 = vunpack.c.l.b16 %v638
          %v647 = vpack.c.b16 %v646, %v646
          %648 = vrot.lane.b32.xlu0 %v647, 120
          %v649 = vpop.permute.xlu0 %648
          %vm650 = vcmask 64512
          %v652 = vsel %vm650, %v644, 0
          %v655 = vsel %vm650, %v649, 0
          %657 = vmatprep.subr.bf16.mxu0 0
          %658 = vmatpush1.bf16.xpose.msra.mxu0 %v655
          %659 = vmatprep.subr.bf16.mxu0 0
          %660 = vmatpush1.bf16.xpose.msra.mxu0 0
          %661 = vmatprep.subr.bf16.mxu0 0
          %662 = vmatpush1.bf16.xpose.msra.mxu0 0
          %663 = vmatprep.subr.bf16.mxu0 0
          %664 = vmatpush1.bf16.xpose.msra.mxu0 0
          %665 = vmatprep.subr.bf16.mxu0 0
          %666 = vmatpush1.bf16.xpose.msra.mxu0 0
          %667 = vmatprep.subr.bf16.mxu0 0
          %668 = vmatpush1.bf16.xpose.msra.mxu0 0
          %669 = vmatprep.subr.bf16.mxu0 0
          %670 = vmatpush1.bf16.xpose.msra.mxu0 0
          %671 = vmatprep.subr.bf16.mxu0 0
          %672 = vmatpush1.bf16.xpose.msra.mxu0 0
          %673 = vmatprep.subr.bf16.mxu0 0
          %674 = vmatpush1.bf16.xpose.msra.mxu0 0
          %675 = vmatprep.subr.bf16.mxu0 0
          %676 = vmatpush1.bf16.xpose.msra.mxu0 0
          %677 = vmatprep.subr.bf16.mxu0 0
          %678 = vmatpush1.bf16.xpose.msra.mxu0 0
          %679 = vmatprep.subr.bf16.mxu0 0
          %680 = vmatpush1.bf16.xpose.msra.mxu0 0
          %681 = vmatprep.subr.bf16.mxu0 0
          %682 = vmatpush1.bf16.xpose.msra.mxu0 0
          %683 = vmatprep.subr.bf16.mxu0 0
          %684 = vmatpush1.bf16.xpose.msra.mxu0 0
          %685 = vmatprep.subr.bf16.mxu0 0
          %686 = vmatpush1.bf16.xpose.msra.mxu0 0
          %687 = vmatprep.subr.bf16.mxu0 0
          %688 = vmatpush1.bf16.xpose.msra.mxu0 0
          %689 = vmatprep.mubr.bf16.mxu0 0
          %690 = vmatmul.mubr.bf16.gmra.mrb[0].mxu0 %v652
          %v691 = vpop.f32.mrb[0].mxu0
          %v692 = vadd.f32 0.0, %v691
          %v693 = vpop.f32.mrb[0].mxu0
          %v694 = vpop.f32.mrb[0].mxu0
          %v695 = vpop.f32.mrb[0].mxu0
          %696 = vdwg.mxu0
          %v697 = vlaneseq
          %v698 = vshrl.u32 %v697, 7
          %v699 = vstv %s324
          %v700 = vadd.s32 %v699, %v698
          %v701 = vstv %s633
          %v702 = vadd.s32 %v701, %v389
          %vm703 = vcmp.ge.s32.totalorder %v700, %v702
          %v704 = vsel %vm703, %v692, -1e+30
          %v705 = vsel %vm650, %v704, -inf
          %706 = vmax.xlane.f32.xlu0 %v705
          %v707 = vpop.xlane.xlu0 %706
          %v708 = vmax.f32 %v630, %v707
          %v709 = vsub.f32 %v630, %v708
          %v710 = vmul.f32 %v709, 1.442695
          %v711 = vpow.pop %v710
          %v712 = vsub.f32 %v704, %v708
          %v713 = vpack.c.bf16 %v712, %v712
          %v715 = vmul.bf16 %v713, 1069105081
          %v716 = vpow.bf16.pop %v715
          %v717 = vmul.f32 %v711, %v631
          %v718 = vunpack.c.l.bf16 %v716
          %v719 = vsel %vm650, %v718, 0.0
          %720 = vadd.xlane.f32.xlu0 %v719
          %v721 = vpop.xlane.xlu0 %720
          %v722 = vadd.f32 %v717, %v721
          %v723 = vmul.f32 %v711, %v632
          %v725 = vunpack.c.l.b16 %v641
          %v726 = vpack.c.b16 %v725, %v725
          %727 = vrot.lane.b32.xlu0 %v726, 120
          %v728 = vpop.permute.xlu0 %727
          %v730 = vsel %vm650, %v716, 0
          %vm732 = vcmask 1043456
          %v734 = vsel %vm732, %v728, 0
          %736 = vmatprep.subr.bf16.mxu0 0
          %737 = vmatpush1.bf16.msra.mxu0 %v734
          %738 = vmatprep.subr.bf16.mxu0 0
          %739 = vmatpush1.bf16.msra.mxu0 0
          %740 = vmatprep.subr.bf16.mxu0 0
          %741 = vmatpush1.bf16.msra.mxu0 0
          %742 = vmatprep.subr.bf16.mxu0 0
          %743 = vmatpush1.bf16.msra.mxu0 0
          %744 = vmatprep.subr.bf16.mxu0 0
          %745 = vmatpush1.bf16.msra.mxu0 0
          %746 = vmatprep.subr.bf16.mxu0 0
          %747 = vmatpush1.bf16.msra.mxu0 0
          %748 = vmatprep.subr.bf16.mxu0 0
          %749 = vmatpush1.bf16.msra.mxu0 0
          %750 = vmatprep.subr.bf16.mxu0 0
          %751 = vmatpush1.bf16.msra.mxu0 0
          %752 = vmatprep.subr.bf16.mxu0 0
          %753 = vmatpush1.bf16.msra.mxu0 0
          %754 = vmatprep.subr.bf16.mxu0 0
          %755 = vmatpush1.bf16.msra.mxu0 0
          %756 = vmatprep.subr.bf16.mxu0 0
          %757 = vmatpush1.bf16.msra.mxu0 0
          %758 = vmatprep.subr.bf16.mxu0 0
          %759 = vmatpush1.bf16.msra.mxu0 0
          %760 = vmatprep.subr.bf16.mxu0 0
          %761 = vmatpush1.bf16.msra.mxu0 0
          %762 = vmatprep.subr.bf16.mxu0 0
          %763 = vmatpush1.bf16.msra.mxu0 0
          %764 = vmatprep.subr.bf16.mxu0 0
          %765 = vmatpush1.bf16.msra.mxu0 0
          %766 = vmatprep.subr.bf16.mxu0 0
          %767 = vmatpush1.bf16.msra.mxu0 0
          %768 = vmatprep.mubr.bf16.mxu0 0
          %769 = vmatmul.mubr.bf16.gmra.mrb[0].mxu0 %v730
          %v770 = vpop.f32.mrb[0].mxu0
          %v771 = vadd.f32 0.0, %v770
          %v772 = vpop.f32.mrb[0].mxu0
          %v773 = vpop.f32.mrb[0].mxu0
          %v774 = vpop.f32.mrb[0].mxu0
          %775 = vdwg.mxu0
          %v776 = vadd.f32 %v723, %v771
        $region68: #{tpu_custom_call.1} parent=39 // loop_footer
          %s627 = sadd.s32 %s625, 1
        $region69: #{tpu_custom_call.1} parent=39 // loop_footer_branch
          %624 = sbr.rel target = $region65
        $region70: #{tpu_custom_call.1} parent=39 // loop_exit
          _
        %v777 = vrcp.pop %v631
        %v778 = vmul.f32 %v632, %v777
        %v779 = vpack.c.bf16 %v778, %v778
        %v781 = vunpack.c.l.b16 %v779
        %v782 = vpack.c.b16 %v781, %v781
        %783 = vrot.lane.b32.xlu0 %v782, 8
        %v784 = vpop.permute.xlu0 %783
        %vm786 = vcmask 126016
        %787 = vst.msk [vmem:[#allocation4] sm:$0xf] %vm786, %v784
        // While loop
        $region71: #{tpu_custom_call.1} parent=39 // loop_pre_header
          _
        $region72: #{tpu_custom_call.1} parent=39 // loop_header
          %s789 = sphi 0, %s791
          %p790 = scmp.ge.s32.totalorder %s789, %s478
          %v794 = vphi -1e+30, %v872
          %v795 = vphi 0.0, %v886
          %v796 = vphi 0.0, %v940
        $region73: #{tpu_custom_call.1} parent=39 // loop_header_branch
          %793 = sbr.rel (%p790) target = $region77
        $region74: #{tpu_custom_call.1} parent=39 // loop_body
          %s797 = smul.u32 %s789, 8
          %s798 = sshra.s32 %s797, 3
          %s799 = sand.u32 %s797, 7
          %s800 = smul.addr %s798, 4
          %s801 = scalar_lea.vmem [#allocation2], %s800
          %v802 = vld [vmem:[%s801] sm:$0xf]
          %s803 = smul.addr %s798, 4
          %s804 = scalar_lea.vmem [#allocation3], %s803
          %v805 = vld [vmem:[%s804] sm:$0xf]
          %807 = vrot.lane.b32.xlu0 %v477, 112
          %v808 = vpop.permute.xlu0 %807
          %v810 = vunpack.c.l.b16 %v802
          %v811 = vpack.c.b16 %v810, %v810
          %812 = vrot.lane.b32.xlu0 %v811, 112
          %v813 = vpop.permute.xlu0 %812
          %vm814 = vcmask 64512
          %v816 = vsel %vm814, %v808, 0
          %v819 = vsel %vm814, %v813, 0
          %821 = vmatprep.subr.bf16.mxu0 0
          %822 = vmatpush1.bf16.xpose.msra.mxu0 %v819
          %823 = vmatprep.subr.bf16.mxu0 0
          %824 = vmatpush1.bf16.xpose.msra.mxu0 0
          %825 = vmatprep.subr.bf16.mxu0 0
          %826 = vmatpush1.bf16.xpose.msra.mxu0 0
          %827 = vmatprep.subr.bf16.mxu0 0
          %828 = vmatpush1.bf16.xpose.msra.mxu0 0
          %829 = vmatprep.subr.bf16.mxu0 0
          %830 = vmatpush1.bf16.xpose.msra.mxu0 0
          %831 = vmatprep.subr.bf16.mxu0 0
          %832 = vmatpush1.bf16.xpose.msra.mxu0 0
          %833 = vmatprep.subr.bf16.mxu0 0
          %834 = vmatpush1.bf16.xpose.msra.mxu0 0
          %835 = vmatprep.subr.bf16.mxu0 0
          %836 = vmatpush1.bf16.xpose.msra.mxu0 0
          %837 = vmatprep.subr.bf16.mxu0 0
          %838 = vmatpush1.bf16.xpose.msra.mxu0 0
          %839 = vmatprep.subr.bf16.mxu0 0
          %840 = vmatpush1.bf16.xpose.msra.mxu0 0
          %841 = vmatprep.subr.bf16.mxu0 0
          %842 = vmatpush1.bf16.xpose.msra.mxu0 0
          %843 = vmatprep.subr.bf16.mxu0 0
          %844 = vmatpush1.bf16.xpose.msra.mxu0 0
          %845 = vmatprep.subr.bf16.mxu0 0
          %846 = vmatpush1.bf16.xpose.msra.mxu0 0
          %847 = vmatprep.subr.bf16.mxu0 0
          %848 = vmatpush1.bf16.xpose.msra.mxu0 0
          %849 = vmatprep.subr.bf16.mxu0 0
          %850 = vmatpush1.bf16.xpose.msra.mxu0 0
          %851 = vmatprep.subr.bf16.mxu0 0
          %852 = vmatpush1.bf16.xpose.msra.mxu0 0
          %853 = vmatprep.mubr.bf16.mxu0 0
          %854 = vmatmul.mubr.bf16.gmra.mrb[0].mxu0 %v816
          %v855 = vpop.f32.mrb[0].mxu0
          %v856 = vadd.f32 0.0, %v855
          %v857 = vpop.f32.mrb[0].mxu0
          %v858 = vpop.f32.mrb[0].mxu0
          %v859 = vpop.f32.mrb[0].mxu0
          %860 = vdwg.mxu0
          %v861 = vlaneseq
          %v862 = vshrl.u32 %v861, 7
          %v863 = vstv %s324
          %v864 = vadd.s32 %v863, %v862
          %v865 = vstv %s797
          %v866 = vadd.s32 %v865, %v389
          %vm867 = vcmp.ge.s32.totalorder %v864, %v866
          %v868 = vsel %vm867, %v856, -1e+30
          %v869 = vsel %vm814, %v868, -inf
          %870 = vmax.xlane.f32.xlu0 %v869
          %v871 = vpop.xlane.xlu0 %870
          %v872 = vmax.f32 %v794, %v871
          %v873 = vsub.f32 %v794, %v872
          %v874 = vmul.f32 %v873, 1.442695
          %v875 = vpow.pop %v874
          %v876 = vsub.f32 %v868, %v872
          %v877 = vpack.c.bf16 %v876, %v876
          %v879 = vmul.bf16 %v877, 1069105081
          %v880 = vpow.bf16.pop %v879
          %v881 = vmul.f32 %v875, %v795
          %v882 = vunpack.c.l.bf16 %v880
          %v883 = vsel %vm814, %v882, 0.0
          %884 = vadd.xlane.f32.xlu0 %v883
          %v885 = vpop.xlane.xlu0 %884
          %v886 = vadd.f32 %v881, %v885
          %v887 = vmul.f32 %v875, %v796
          %v889 = vunpack.c.l.b16 %v805
          %v890 = vpack.c.b16 %v889, %v889
          %891 = vrot.lane.b32.xlu0 %v890, 112
          %v892 = vpop.permute.xlu0 %891
          %v894 = vsel %vm814, %v880, 0
          %vm896 = vcmask 1043456
          %v898 = vsel %vm896, %v892, 0
          %900 = vmatprep.subr.bf16.mxu0 0
          %901 = vmatpush1.bf16.msra.mxu0 %v898
          %902 = vmatprep.subr.bf16.mxu0 0
          %903 = vmatpush1.bf16.msra.mxu0 0
          %904 = vmatprep.subr.bf16.mxu0 0
          %905 = vmatpush1.bf16.msra.mxu0 0
          %906 = vmatprep.subr.bf16.mxu0 0
          %907 = vmatpush1.bf16.msra.mxu0 0
          %908 = vmatprep.subr.bf16.mxu0 0
          %909 = vmatpush1.bf16.msra.mxu0 0
          %910 = vmatprep.subr.bf16.mxu0 0
          %911 = vmatpush1.bf16.msra.mxu0 0
          %912 = vmatprep.subr.bf16.mxu0 0
          %913 = vmatpush1.bf16.msra.mxu0 0
          %914 = vmatprep.subr.bf16.mxu0 0
          %915 = vmatpush1.bf16.msra.mxu0 0
          %916 = vmatprep.subr.bf16.mxu0 0
          %917 = vmatpush1.bf16.msra.mxu0 0
          %918 = vmatprep.subr.bf16.mxu0 0
          %919 = vmatpush1.bf16.msra.mxu0 0
          %920 = vmatprep.subr.bf16.mxu0 0
          %921 = vmatpush1.bf16.msra.mxu0 0
          %922 = vmatprep.subr.bf16.mxu0 0
          %923 = vmatpush1.bf16.msra.mxu0 0
          %924 = vmatprep.subr.bf16.mxu0 0
          %925 = vmatpush1.bf16.msra.mxu0 0
          %926 = vmatprep.subr.bf16.mxu0 0
          %927 = vmatpush1.bf16.msra.mxu0 0
          %928 = vmatprep.subr.bf16.mxu0 0
          %929 = vmatpush1.bf16.msra.mxu0 0
          %930 = vmatprep.subr.bf16.mxu0 0
          %931 = vmatpush1.bf16.msra.mxu0 0
          %932 = vmatprep.mubr.bf16.mxu0 0
          %933 = vmatmul.mubr.bf16.gmra.mrb[0].mxu0 %v894
          %v934 = vpop.f32.mrb[0].mxu0
          %v935 = vadd.f32 0.0, %v934
          %v936 = vpop.f32.mrb[0].mxu0
          %v937 = vpop.f32.mrb[0].mxu0
          %v938 = vpop.f32.mrb[0].mxu0
          %939 = vdwg.mxu0
          %v940 = vadd.f32 %v887, %v935
        $region75: #{tpu_custom_call.1} parent=39 // loop_footer
          %s791 = sadd.s32 %s789, 1
        $region76: #{tpu_custom_call.1} parent=39 // loop_footer_branch
          %788 = sbr.rel target = $region72
        $region77: #{tpu_custom_call.1} parent=39 // loop_exit
          _
        %v941 = vrcp.pop %v795
        %v942 = vmul.f32 %v796, %v941
        %v943 = vpack.c.bf16 %v942, %v942
        %v945 = vunpack.c.l.b16 %v943
        %v946 = vpack.c.b16 %v945, %v945
        %947 = vrot.lane.b32.xlu0 %v946, 16
        %v948 = vpop.permute.xlu0 %947
        %vm950 = vcmask 191616
        %951 = vst.msk [vmem:[#allocation4] sm:$0xf] %vm950, %v948
        // While loop
        $region78: #{tpu_custom_call.1} parent=39 // loop_pre_header
          _
        $region79: #{tpu_custom_call.1} parent=39 // loop_header
          %s953 = sphi 0, %s955
          %p954 = scmp.ge.s32.totalorder %s953, %s478
          %v958 = vphi -1e+30, %v1036
          %v959 = vphi 0.0, %v1050
          %v960 = vphi 0.0, %v1104
        $region80: #{tpu_custom_call.1} parent=39 // loop_header_branch
          %957 = sbr.rel (%p954) target = $region84
        $region81: #{tpu_custom_call.1} parent=39 // loop_body
          %s961 = smul.u32 %s953, 8
          %s962 = sshra.s32 %s961, 3
          %s963 = sand.u32 %s961, 7
          %s964 = smul.addr %s962, 4
          %s965 = scalar_lea.vmem [#allocation2], %s964
          %v966 = vld [vmem:[%s965] sm:$0xf]
          %s967 = smul.addr %s962, 4
          %s968 = scalar_lea.vmem [#allocation3], %s967
          %v969 = vld [vmem:[%s968] sm:$0xf]
          %971 = vrot.lane.b32.xlu0 %v477, 104
          %v972 = vpop.permute.xlu0 %971
          %v974 = vunpack.c.l.b16 %v966
          %v975 = vpack.c.b16 %v974, %v974
          %976 = vrot.lane.b32.xlu0 %v975, 104
          %v977 = vpop.permute.xlu0 %976
          %vm978 = vcmask 64512
          %v980 = vsel %vm978, %v972, 0
          %v983 = vsel %vm978, %v977, 0
          %985 = vmatprep.subr.bf16.mxu0 0
          %986 = vmatpush1.bf16.xpose.msra.mxu0 %v983
          %987 = vmatprep.subr.bf16.mxu0 0
          %988 = vmatpush1.bf16.xpose.msra.mxu0 0
          %989 = vmatprep.subr.bf16.mxu0 0
          %990 = vmatpush1.bf16.xpose.msra.mxu0 0
          %991 = vmatprep.subr.bf16.mxu0 0
          %992 = vmatpush1.bf16.xpose.msra.mxu0 0
          %993 = vmatprep.subr.bf16.mxu0 0
          %994 = vmatpush1.bf16.xpose.msra.mxu0 0
          %995 = vmatprep.subr.bf16.mxu0 0
          %996 = vmatpush1.bf16.xpose.msra.mxu0 0
          %997 = vmatprep.subr.bf16.mxu0 0
          %998 = vmatpush1.bf16.xpose.msra.mxu0 0
          %999 = vmatprep.subr.bf16.mxu0 0
          %1000 = vmatpush1.bf16.xpose.msra.mxu0 0
          %1001 = vmatprep.subr.bf16.mxu0 0
          %1002 = vmatpush1.bf16.xpose.msra.mxu0 0
          %1003 = vmatprep.subr.bf16.mxu0 0
          %1004 = vmatpush1.bf16.xpose.msra.mxu0 0
          %1005 = vmatprep.subr.bf16.mxu0 0
          %1006 = vmatpush1.bf16.xpose.msra.mxu0 0
          %1007 = vmatprep.subr.bf16.mxu0 0
          %1008 = vmatpush1.bf16.xpose.msra.mxu0 0
          %1009 = vmatprep.subr.bf16.mxu0 0
          %1010 = vmatpush1.bf16.xpose.msra.mxu0 0
          %1011 = vmatprep.subr.bf16.mxu0 0
          %1012 = vmatpush1.bf16.xpose.msra.mxu0 0
          %1013 = vmatprep.subr.bf16.mxu0 0
          %1014 = vmatpush1.bf16.xpose.msra.mxu0 0
          %1015 = vmatprep.subr.bf16.mxu0 0
          %1016 = vmatpush1.bf16.xpose.msra.mxu0 0
          %1017 = vmatprep.mubr.bf16.mxu0 0
          %1018 = vmatmul.mubr.bf16.gmra.mrb[0].mxu0 %v980
          %v1019 = vpop.f32.mrb[0].mxu0
          %v1020 = vadd.f32 0.0, %v1019
          %v1021 = vpop.f32.mrb[0].mxu0
          %v1022 = vpop.f32.mrb[0].mxu0
          %v1023 = vpop.f32.mrb[0].mxu0
          %1024 = vdwg.mxu0
          %v1025 = vlaneseq
          %v1026 = vshrl.u32 %v1025, 7
          %v1027 = vstv %s324
          %v1028 = vadd.s32 %v1027, %v1026
          %v1029 = vstv %s961
          %v1030 = vadd.s32 %v1029, %v389
          %vm1031 = vcmp.ge.s32.totalorder %v1028, %v1030
          %v1032 = vsel %vm1031, %v1020, -1e+30
          %v1033 = vsel %vm978, %v1032, -inf
          %1034 = vmax.xlane.f32.xlu0 %v1033
          %v1035 = vpop.xlane.xlu0 %1034
          %v1036 = vmax.f32 %v958, %v1035
          %v1037 = vsub.f32 %v958, %v1036
          %v1038 = vmul.f32 %v1037, 1.442695
          %v1039 = vpow.pop %v1038
          %v1040 = vsub.f32 %v1032, %v1036
          %v1041 = vpack.c.bf16 %v1040, %v1040
          %v1043 = vmul.bf16 %v1041, 1069105081
          %v1044 = vpow.bf16.pop %v1043
          %v1045 = vmul.f32 %v1039, %v959
          %v1046 = vunpack.c.l.bf16 %v1044
          %v1047 = vsel %vm978, %v1046, 0.0
          %1048 = vadd.xlane.f32.xlu0 %v1047
          %v1049 = vpop.xlane.xlu0 %1048
          %v1050 = vadd.f32 %v1045, %v1049
          %v1051 = vmul.f32 %v1039, %v960
          %v1053 = vunpack.c.l.b16 %v969
          %v1054 = vpack.c.b16 %v1053, %v1053
          %1055 = vrot.lane.b32.xlu0 %v1054, 104
          %v1056 = vpop.permute.xlu0 %1055
          %v1058 = vsel %vm978, %v1044, 0
          %vm1060 = vcmask 1043456
          %v1062 = vsel %vm1060, %v1056, 0
          %1064 = vmatprep.subr.bf16.mxu0 0
          %1065 = vmatpush1.bf16.msra.mxu0 %v1062
          %1066 = vmatprep.subr.bf16.mxu0 0
          %1067 = vmatpush1.bf16.msra.mxu0 0
          %1068 = vmatprep.subr.bf16.mxu0 0
          %1069 = vmatpush1.bf16.msra.mxu0 0
          %1070 = vmatprep.subr.bf16.mxu0 0
          %1071 = vmatpush1.bf16.msra.mxu0 0
          %1072 = vmatprep.subr.bf16.mxu0 0
          %1073 = vmatpush1.bf16.msra.mxu0 0
          %1074 = vmatprep.subr.bf16.mxu0 0
          %1075 = vmatpush1.bf16.msra.mxu0 0
          %1076 = vmatprep.subr.bf16.mxu0 0
          %1077 = vmatpush1.bf16.msra.mxu0 0
          %1078 = vmatprep.subr.bf16.mxu0 0
          %1079 = vmatpush1.bf16.msra.mxu0 0
          %1080 = vmatprep.subr.bf16.mxu0 0
          %1081 = vmatpush1.bf16.msra.mxu0 0
          %1082 = vmatprep.subr.bf16.mxu0 0
          %1083 = vmatpush1.bf16.msra.mxu0 0
          %1084 = vmatprep.subr.bf16.mxu0 0
          %1085 = vmatpush1.bf16.msra.mxu0 0
          %1086 = vmatprep.subr.bf16.mxu0 0
          %1087 = vmatpush1.bf16.msra.mxu0 0
          %1088 = vmatprep.subr.bf16.mxu0 0
          %1089 = vmatpush1.bf16.msra.mxu0 0
          %1090 = vmatprep.subr.bf16.mxu0 0
          %1091 = vmatpush1.bf16.msra.mxu0 0
          %1092 = vmatprep.subr.bf16.mxu0 0
          %1093 = vmatpush1.bf16.msra.mxu0 0
          %1094 = vmatprep.subr.bf16.mxu0 0
          %1095 = vmatpush1.bf16.msra.mxu0 0
          %1096 = vmatprep.mubr.bf16.mxu0 0
          %1097 = vmatmul.mubr.bf16.gmra.mrb[0].mxu0 %v1058
          %v1098 = vpop.f32.mrb[0].mxu0
          %v1099 = vadd.f32 0.0, %v1098
          %v1100 = vpop.f32.mrb[0].mxu0
          %v1101 = vpop.f32.mrb[0].mxu0
          %v1102 = vpop.f32.mrb[0].mxu0
          %1103 = vdwg.mxu0
          %v1104 = vadd.f32 %v1051, %v1099
        $region82: #{tpu_custom_call.1} parent=39 // loop_footer
          %s955 = sadd.s32 %s953, 1
        $region83: #{tpu_custom_call.1} parent=39 // loop_footer_branch
          %952 = sbr.rel target = $region79
        $region84: #{tpu_custom_call.1} parent=39 // loop_exit
          _
        %v1105 = vrcp.pop %v959
        %v1106 = vmul.f32 %v960, %v1105
        %v1107 = vpack.c.bf16 %v1106, %v1106
        %v1109 = vunpack.c.l.b16 %v1107
        %v1110 = vpack.c.b16 %v1109, %v1109
        %1111 = vrot.lane.b32.xlu0 %v1110, 24
        %v1112 = vpop.permute.xlu0 %1111
        %vm1114 = vcmask 257216
        %1115 = vst.msk [vmem:[#allocation4] sm:$0xf] %vm1114, %v1112
        %v1116 = vld [vmem:[#allocation4] sm:$0xf]
        %v1117 = vld [vmem:[#allocation10] sm:$0xf]
        %v1118 = vld [vmem:[#allocation10 + $0x4] sm:$0xf]
        %v1119 = vld [vmem:[#allocation10 + $0x8] sm:$0xf]
        %v1120 = vld [vmem:[#allocation10 + $0xc] sm:$0xf]
        %v1125 = vunpack.c.l.b16 %v1117
        %v1126 = vunpack.c.l.b16 %v1118
        %v1127 = vunpack.c.l.b16 %v1119
        %v1128 = vunpack.c.l.b16 %v1120
        %v1129 = vpack.c.b16 %v1126, %v1125
        %v1130 = vpack.c.b16 %v1128, %v1127
        %v1134 = vsel %vm342, %v1116, 0
        %1136 = vmatprep.subr.bf16.mxu0 0
        %1137 = vmatpush1.bf16.msra.mxu0 %v1129
        %1138 = vmatprep.subr.bf16.mxu0 0
        %1139 = vmatpush1.bf16.msra.mxu0 %v1130
        %1140 = vmatprep.subr.bf16.mxu0 0
        %1141 = vmatpush1.bf16.msra.mxu0 0
        %1142 = vmatprep.subr.bf16.mxu0 0
        %1143 = vmatpush1.bf16.msra.mxu0 0
        %1144 = vmatprep.subr.bf16.mxu0 0
        %1145 = vmatpush1.bf16.msra.mxu0 0
        %1146 = vmatprep.subr.bf16.mxu0 0
        %1147 = vmatpush1.bf16.msra.mxu0 0
        %1148 = vmatprep.subr.bf16.mxu0 0
        %1149 = vmatpush1.bf16.msra.mxu0 0
        %1150 = vmatprep.subr.bf16.mxu0 0
        %1151 = vmatpush1.bf16.msra.mxu0 0
        %1152 = vmatprep.subr.bf16.mxu0 0
        %1153 = vmatpush1.bf16.msra.mxu0 0
        %1154 = vmatprep.subr.bf16.mxu0 0
        %1155 = vmatpush1.bf16.msra.mxu0 0
        %1156 = vmatprep.subr.bf16.mxu0 0
        %1157 = vmatpush1.bf16.msra.mxu0 0
        %1158 = vmatprep.subr.bf16.mxu0 0
        %1159 = vmatpush1.bf16.msra.mxu0 0
        %1160 = vmatprep.subr.bf16.mxu0 0
        %1161 = vmatpush1.bf16.msra.mxu0 0
        %1162 = vmatprep.subr.bf16.mxu0 0
        %1163 = vmatpush1.bf16.msra.mxu0 0
        %1164 = vmatprep.subr.bf16.mxu0 0
        %1165 = vmatpush1.bf16.msra.mxu0 0
        %1166 = vmatprep.subr.bf16.mxu0 0
        %1167 = vmatpush1.bf16.msra.mxu0 0
        %1168 = vmatprep.mubr.bf16.mxu0 0
        %1169 = vmatmul.mubr.bf16.gmra.mrb[0].mxu0 %v1134
        %v1170 = vpop.f32.mrb[0].mxu0
        %v1171 = vadd.f32 0.0, %v1170
        %v1172 = vpop.f32.mrb[0].mxu0
        %v1173 = vpop.f32.mrb[0].mxu0
        %v1174 = vpop.f32.mrb[0].mxu0
        %1175 = vdwg.mxu0
        %1176 = vst.msk [vmem:[%s318] sm:$0xff] %vm342, %v1171
        %s1177 = sand.u32 %s168, 1
        %s1178 = scalar_lea.sflag [#allocation7], %s1177
        %s1179 = sand.u32 %s168, 1
        %s1180 = smul.addr %s1179, 8
        %s1181 = scalar_lea.vmem [#allocation13], %s1180
        // Predicated region
        $region85: #{tpu_custom_call.1} parent=39 // pred_check
          %p1182 = pneg %p178
        $region86: #{tpu_custom_call.1} parent=39 // pred_check_branch
          %1184 = sbr.rel (%p1182) target = $region88
        $region87: #{tpu_custom_call.1} parent=39 // pred_region
          %s1186 = ssub.s32 128, 128
          %1187 = vsyncadd %s1178, %s1186
          %s1188 = sadd.s32 %s29, %s28
          %s1189 = smul.addr %s1188, 128
          %s1190 = scalar_lea.hbm %s5, %s1189
          %s1192 = sshll.u32 %s1181, 4
          %s1193 = int_to_ptr.vmem [resolvable:$true] %s1192
          %1195 = dma.vmem_to_hbm [thread:$0]  %s1193, 128, %s1190, %s1178
        $region88: #{tpu_custom_call.1} parent=39 // pred_fallthru
          _
      $region40: #{tpu_custom_call.1} parent=5 // pred_fallthru
        _
      %p1196 = scmp.le.s32.totalorder 2, %s19
      // Predicated region
      $region89: #{tpu_custom_call.1} parent=5 // pred_check
        %p1197 = pneg %p1196
      $region90: #{tpu_custom_call.1} parent=5 // pred_check_branch
        %1199 = sbr.rel (%p1197) target = $region92
      $region91: #{tpu_custom_call.1} parent=5 // pred_region
        %s1200 = ssub.s32 %s19, 2
        // Predicated region
        $region93: #{tpu_custom_call.1} parent=91 // pred_check
          %p1201 = pneg %p184
        $region94: #{tpu_custom_call.1} parent=91 // pred_check_branch
          %1203 = sbr.rel (%p1201) target = $region96
        $region95: #{tpu_custom_call.1} parent=91 // pred_region
          %s1204 = sand.u32 %s169, 1
          %s1205 = scalar_lea.sflag [#allocation7], %s1204
          %s1206 = sand.u32 %s169, 1
          %s1207 = smul.addr %s1206, 8
          %s1208 = scalar_lea.vmem [#allocation13], %s1207
          %1209 = dma.done %s1205, 128
        $region96: #{tpu_custom_call.1} parent=91 // pred_fallthru
          _
      $region92: #{tpu_custom_call.1} parent=5 // pred_fallthru
        _
    $region6: #{tpu_custom_call.1} parent=1 // loop_footer
      %s23 = sadd.s32 1, %s19
    $region7: #{tpu_custom_call.1} parent=1 // loop_footer_branch
      %18 = sbr.rel target = $region3
    $region8: #{tpu_custom_call.1} parent=1 // loop_exit
      _
    %1210 = vsyncpa [#allocation6], 1
    %s1211 = scalar_lea.sflag [#allocation6], 1
    %1212 = vsyncpa %s1211, 1
    %1213 = vsyncpa [#allocation9], 1
    %1214 = vsyncpa [#allocation12], 1
    %1215 = vsyncpa [#allocation7], 1
    %s1216 = scalar_lea.sflag [#allocation7], 1
    %1217 = vsyncpa %s1216, 1

</llo_original>
